<compile_context>
chip_gen: v5e
topology: v5e:2x2
jax: 0.10.0
libtpu: 0.0.40
codegen_flags: <defaults>
</compile_context>

<pallas_src>
import numpy as np
import jax
import jax.numpy as jnp
from jax.experimental import pallas as pl
from jax.experimental.pallas import tpu as pltpu

NEURON_TYPES = ("relu", "tanh", "sig", "lrelu")   # fixes mask-row ordering
LANE = 128
SUBLANE = 8


def _round_up(n, m):
    return ((n + m - 1) // m) * m


def _mixed_act_opt(h, r, n, t, s):
    """h: (TB, Hp) f32; r/n/t/s: (1, Hp) f32 per-neuron coefficients."""
    return (r * jnp.maximum(h, 0.0)
            + n * jnp.minimum(h, 0.0)
            + t * jnp.tanh(h)
            + s * (jnp.tanh(0.5 * h) + 1.0))     # s*(tanh(h/2)+1) == m_sig*sigmoid(h)


def mlp_kernel(x_ref,
               w0_ref, b0_ref, r0_ref, n0_ref, t0_ref, s0_ref,
               w1_ref, b1_ref, r1_ref, n1_ref, t1_ref, s1_ref,
               w2_ref, out_ref):
    cdt = w1_ref.dtype
    # layer 0: Linear + mixed activation
    h = jnp.dot(x_ref[...], w0_ref[...], preferred_element_type=jnp.float32)
    h = _mixed_act_opt(h + b0_ref[...], r0_ref[...], n0_ref[...],
                       t0_ref[...], s0_ref[...])
    # layer 1: Linear + mixed activation
    h = jnp.dot(h.astype(cdt), w1_ref[...], preferred_element_type=jnp.float32)
    h = _mixed_act_opt(h + b1_ref[...], r1_ref[...], n1_ref[...],
                       t1_ref[...], s1_ref[...])
    # final layer: Linear, no bias
    out_ref[...] = jnp.dot(h.astype(cdt), w2_ref[...],
                           preferred_element_type=jnp.float32)


# ----------------------------- wrapper ----------------------------------------
def _pad2(a, rows, cols):
    return jnp.pad(a, ((0, rows - a.shape[0]), (0, cols - a.shape[1])))


def _coeff_rows(masks, h_pad):
    """(4, H) one-hot masks (relu/tanh/sig/lrelu) -> four (1, Hp) coeff rows."""
    m = np.asarray(masks, dtype=np.float32)
    m_relu, m_tanh, m_sig, m_lrelu = m[0], m[1], m[2], m[3]
    coeffs = np.stack([m_relu + m_lrelu,     # r : relu term (lrelu positive part)
                       0.01 * m_lrelu,       # n : min(h,0) term (LeakyReLU slope)
                       m_tanh,               # t : tanh term
                       0.5 * m_sig])         # s : sigmoid via tanh(h/2)
    coeffs = np.pad(coeffs, ((0, 0), (0, h_pad - coeffs.shape[1])))
    return [jnp.asarray(c.reshape(1, h_pad)) for c in coeffs]


def neuralnet_forward(x, w0, b0, m0, w1, b1, m1, w2,
                      *, block_b=128, compute_dtype=jnp.float32):
    B, d_in = x.shape
    h0, h1, n_cls = w0.shape[1], w1.shape[1], w2.shape[1]

    dp = _round_up(d_in, LANE)
    h0p = _round_up(h0, LANE)
    h1p = _round_up(h1, LANE)
    cp = _round_up(n_cls, LANE)

    tb = min(block_b, _round_up(B, SUBLANE))
    bp = _round_up(B, tb)

    xp = _pad2(x, bp, dp).astype(compute_dtype)
    w0p = _pad2(w0, dp, h0p).astype(compute_dtype)
    w1p = _pad2(w1, h0p, h1p).astype(compute_dtype)
    w2p = _pad2(w2, h1p, cp).astype(compute_dtype)
    b0p = _pad2(b0, 1, h0p).astype(jnp.float32)
    b1p = _pad2(b1, 1, h1p).astype(jnp.float32)
    r0, n0, t0, s0 = _coeff_rows(m0, h0p)
    r1, n1, t1, s1 = _coeff_rows(m1, h1p)

    def resident(a):
        # full array, constant block index -> DMA'd once, VMEM-resident
        return pl.BlockSpec(a.shape, lambda i: (0,) * a.ndim)

    out = pl.pallas_call(
        mlp_kernel,
        grid=(bp // tb,),
        in_specs=[pl.BlockSpec((tb, dp), lambda i: (i, 0)),
                  resident(w0p), resident(b0p),
                  resident(r0), resident(n0), resident(t0), resident(s0),
                  resident(w1p), resident(b1p),
                  resident(r1), resident(n1), resident(t1), resident(s1),
                  resident(w2p)],
        out_specs=pl.BlockSpec((tb, cp), lambda i: (i, 0)),
        out_shape=jax.ShapeDtypeStruct((bp, cp), jnp.float32),
        compiler_params=pltpu.CompilerParams(
            dimension_semantics=("parallel",)),
    )(xp, w0p, b0p, r0, n0, t0, s0, w1p, b1p, r1, n1, t1, s1, w2p)
    return out[:B, :n_cls]


# ----------------------------- reference (plain JAX) ---------------------------
def neuralnet_ref(x, w0, b0, m0, w1, b1, m1, w2):
    def mixed(h, masks):
        relu = jnp.maximum(h, 0.0)
        tanh = jnp.tanh(h)
        sig = jax.nn.sigmoid(h)
        lrelu = jnp.where(h > 0.0, h, 0.01 * h)        # nn.LeakyReLU default slope
        return (masks[0] * relu + masks[1] * tanh
                + masks[2] * sig + masks[3] * lrelu)
    h = mixed(x @ w0 + b0, m0)
    h = mixed(h @ w1 + b1, m1)
    return h @ w2


# ----------------------------- deterministic params ----------------------------
def make_masks(hidden, rng):
    """Random per-neuron activation assignment -> (num_types, hidden) one-hot."""
    split = rng.choice(len(NEURON_TYPES), size=hidden)    # like np.random.choice
    masks = np.zeros((len(NEURON_TYPES), hidden), dtype=np.float32)
    masks[split, np.arange(hidden)] = 1.0
    return jnp.asarray(masks)


def make_linear(key, fan_in, fan_out, bias=True):
    kw, kb = jax.random.split(key)
    bound = 1.0 / np.sqrt(fan_in)
    w = jax.random.uniform(kw, (fan_in, fan_out), jnp.float32, -bound, bound)
    if not bias:
        return w, None
    b = jax.random.uniform(kb, (1, fan_out), jnp.float32, -bound, bound)
    return w, b


if __name__ == "__main__":
    input_size, hidden_size, num_classes, batch = 16, [32, 64], 8, 256

    key = jax.random.PRNGKey(0)
    k0, k1, k2, kx = jax.random.split(key, 4)
    rng = np.random.RandomState(0)

    w0, b0 = make_linear(k0, input_size, hidden_size[0])
    m0 = make_masks(hidden_size[0], rng)
    w1, b1 = make_linear(k1, hidden_size[0], hidden_size[1])
    m1 = make_masks(hidden_size[1], rng)
    w2, _ = make_linear(k2, hidden_size[1], num_classes, bias=False)

    x = jax.random.normal(kx, (batch, input_size), jnp.float32)

    ref = jax.block_until_ready(neuralnet_ref(x, w0, b0, m0, w1, b1, m1, w2))

    # f32 path — tight numerical check
    out = jax.block_until_ready(
        neuralnet_forward(x, w0, b0, m0, w1, b1, m1, w2))
    np.testing.assert_allclose(np.asarray(out), np.asarray(ref),
                               rtol=1e-5, atol=2e-5)

    # bf16 weights/activations with f32 MXU accumulation (v6e/v7x fast path)
    out_bf16 = jax.block_until_ready(
        neuralnet_forward(x, w0, b0, m0, w1, b1, m1, w2,
                          compute_dtype=jnp.bfloat16))
    np.testing.assert_allclose(np.asarray(out_bf16), np.asarray(ref),
                               rtol=1e-1, atol=1e-1)

    print("KERNEL_OK")
</pallas_src>

<mosaic_0001>
module attributes {stable_mosaic.version = 11 : i64} {
  func.func @mlp_kernel(%arg0: i32, %arg1: memref<128x128xf32, #tpu.memory_space<vmem>>, %arg2: memref<128x128xf32, #tpu.memory_space<vmem>>, %arg3: memref<1x128xf32, #tpu.memory_space<vmem>>, %arg4: memref<1x128xf32, #tpu.memory_space<vmem>>, %arg5: memref<1x128xf32, #tpu.memory_space<vmem>>, %arg6: memref<1x128xf32, #tpu.memory_space<vmem>>, %arg7: memref<1x128xf32, #tpu.memory_space<vmem>>, %arg8: memref<128x128xf32, #tpu.memory_space<vmem>>, %arg9: memref<1x128xf32, #tpu.memory_space<vmem>>, %arg10: memref<1x128xf32, #tpu.memory_space<vmem>>, %arg11: memref<1x128xf32, #tpu.memory_space<vmem>>, %arg12: memref<1x128xf32, #tpu.memory_space<vmem>>, %arg13: memref<1x128xf32, #tpu.memory_space<vmem>>, %arg14: memref<128x128xf32, #tpu.memory_space<vmem>>, %arg15: memref<128x128xf32, #tpu.memory_space<vmem>>) attributes {dimension_semantics = [#tpu.dimension_semantics<parallel>], iteration_bounds = array<i64: 2>, scalar_prefetch = 0 : i64, scratch_operands = 0 : i64, tpu.core_type = #tpu.core_type<tc>, window_params = [{transform_indices = @transform_0, window_bounds = array<i64: 128, 128>}, {pipeline_mode = #tpu.pipeline_mode<synchronous>, transform_indices = @transform_1, window_bounds = array<i64: 128, 128>}, {pipeline_mode = #tpu.pipeline_mode<synchronous>, transform_indices = @transform_2, window_bounds = array<i64: 1, 128>}, {pipeline_mode = #tpu.pipeline_mode<synchronous>, transform_indices = @transform_3, window_bounds = array<i64: 1, 128>}, {pipeline_mode = #tpu.pipeline_mode<synchronous>, transform_indices = @transform_4, window_bounds = array<i64: 1, 128>}, {pipeline_mode = #tpu.pipeline_mode<synchronous>, transform_indices = @transform_5, window_bounds = array<i64: 1, 128>}, {pipeline_mode = #tpu.pipeline_mode<synchronous>, transform_indices = @transform_6, window_bounds = array<i64: 1, 128>}, {pipeline_mode = #tpu.pipeline_mode<synchronous>, transform_indices = @transform_7, window_bounds = array<i64: 128, 128>}, {pipeline_mode = #tpu.pipeline_mode<synchronous>, transform_indices = @transform_8, window_bounds = array<i64: 1, 128>}, {pipeline_mode = #tpu.pipeline_mode<synchronous>, transform_indices = @transform_9, window_bounds = array<i64: 1, 128>}, {pipeline_mode = #tpu.pipeline_mode<synchronous>, transform_indices = @transform_10, window_bounds = array<i64: 1, 128>}, {pipeline_mode = #tpu.pipeline_mode<synchronous>, transform_indices = @transform_11, window_bounds = array<i64: 1, 128>}, {pipeline_mode = #tpu.pipeline_mode<synchronous>, transform_indices = @transform_12, window_bounds = array<i64: 1, 128>}, {pipeline_mode = #tpu.pipeline_mode<synchronous>, transform_indices = @transform_13, window_bounds = array<i64: 128, 128>}, {transform_indices = @transform_14, window_bounds = array<i64: 128, 128>}]} {
    %c0 = arith.constant 0 : index
    %c0_0 = arith.constant 0 : index
    %0 = vector.load %arg1[%c0, %c0_0] : memref<128x128xf32, #tpu.memory_space<vmem>>, vector<128x128xf32>
    %c0_1 = arith.constant 0 : index
    %c0_2 = arith.constant 0 : index
    %1 = vector.load %arg2[%c0_1, %c0_2] : memref<128x128xf32, #tpu.memory_space<vmem>>, vector<128x128xf32>
    %cst = arith.constant dense<0.000000e+00> : vector<128x128xf32>
    %2 = tpu.matmul %0, %1, %cst {dimension_numbers = #tpu.dot_dimension_numbers<[1], [0], [0], [1], [0, 0, 1, 1], [], []>} : vector<128x128xf32>, vector<128x128xf32>, vector<128x128xf32> -> vector<128x128xf32>
    %c0_3 = arith.constant 0 : index
    %c0_4 = arith.constant 0 : index
    %3 = vector.load %arg3[%c0_3, %c0_4] : memref<1x128xf32, #tpu.memory_space<vmem>>, vector<1x128xf32>
    %4 = vector.broadcast %3 : vector<1x128xf32> to vector<128x128xf32>
    %5 = arith.addf %2, %4 : vector<128x128xf32>
    %c0_5 = arith.constant 0 : index
    %c0_6 = arith.constant 0 : index
    %6 = vector.load %arg4[%c0_5, %c0_6] : memref<1x128xf32, #tpu.memory_space<vmem>>, vector<1x128xf32>
    %c0_7 = arith.constant 0 : index
    %c0_8 = arith.constant 0 : index
    %7 = vector.load %arg5[%c0_7, %c0_8] : memref<1x128xf32, #tpu.memory_space<vmem>>, vector<1x128xf32>
    %c0_9 = arith.constant 0 : index
    %c0_10 = arith.constant 0 : index
    %8 = vector.load %arg6[%c0_9, %c0_10] : memref<1x128xf32, #tpu.memory_space<vmem>>, vector<1x128xf32>
    %c0_11 = arith.constant 0 : index
    %c0_12 = arith.constant 0 : index
    %9 = vector.load %arg7[%c0_11, %c0_12] : memref<1x128xf32, #tpu.memory_space<vmem>>, vector<1x128xf32>
    %cst_13 = arith.constant 0.000000e+00 : f32
    %10 = vector.broadcast %cst_13 : f32 to vector<128x128xf32>
    %11 = arith.maximumf %5, %10 : vector<128x128xf32>
    %12 = vector.broadcast %6 : vector<1x128xf32> to vector<128x128xf32>
    %13 = arith.mulf %12, %11 : vector<128x128xf32>
    %cst_14 = arith.constant 0.000000e+00 : f32
    %14 = vector.broadcast %cst_14 : f32 to vector<128x128xf32>
    %15 = arith.minimumf %5, %14 : vector<128x128xf32>
    %16 = vector.broadcast %7 : vector<1x128xf32> to vector<128x128xf32>
    %17 = arith.mulf %16, %15 : vector<128x128xf32>
    %18 = arith.addf %13, %17 : vector<128x128xf32>
    %19 = math.tanh %5 : vector<128x128xf32>
    %20 = vector.broadcast %8 : vector<1x128xf32> to vector<128x128xf32>
    %21 = arith.mulf %20, %19 : vector<128x128xf32>
    %22 = arith.addf %18, %21 : vector<128x128xf32>
    %cst_15 = arith.constant 5.000000e-01 : f32
    %23 = vector.broadcast %cst_15 : f32 to vector<128x128xf32>
    %24 = arith.mulf %23, %5 : vector<128x128xf32>
    %25 = math.tanh %24 : vector<128x128xf32>
    %cst_16 = arith.constant 1.000000e+00 : f32
    %26 = vector.broadcast %cst_16 : f32 to vector<128x128xf32>
    %27 = arith.addf %25, %26 : vector<128x128xf32>
    %28 = vector.broadcast %9 : vector<1x128xf32> to vector<128x128xf32>
    %29 = arith.mulf %28, %27 : vector<128x128xf32>
    %30 = arith.addf %22, %29 : vector<128x128xf32>
    %c0_17 = arith.constant 0 : index
    %c0_18 = arith.constant 0 : index
    %31 = vector.load %arg8[%c0_17, %c0_18] : memref<128x128xf32, #tpu.memory_space<vmem>>, vector<128x128xf32>
    %cst_19 = arith.constant dense<0.000000e+00> : vector<128x128xf32>
    %32 = tpu.matmul %30, %31, %cst_19 {dimension_numbers = #tpu.dot_dimension_numbers<[1], [0], [0], [1], [0, 0, 1, 1], [], []>} : vector<128x128xf32>, vector<128x128xf32>, vector<128x128xf32> -> vector<128x128xf32>
    %c0_20 = arith.constant 0 : index
    %c0_21 = arith.constant 0 : index
    %33 = vector.load %arg9[%c0_20, %c0_21] : memref<1x128xf32, #tpu.memory_space<vmem>>, vector<1x128xf32>
    %34 = vector.broadcast %33 : vector<1x128xf32> to vector<128x128xf32>
    %35 = arith.addf %32, %34 : vector<128x128xf32>
    %c0_22 = arith.constant 0 : index
    %c0_23 = arith.constant 0 : index
    %36 = vector.load %arg10[%c0_22, %c0_23] : memref<1x128xf32, #tpu.memory_space<vmem>>, vector<1x128xf32>
    %c0_24 = arith.constant 0 : index
    %c0_25 = arith.constant 0 : index
    %37 = vector.load %arg11[%c0_24, %c0_25] : memref<1x128xf32, #tpu.memory_space<vmem>>, vector<1x128xf32>
    %c0_26 = arith.constant 0 : index
    %c0_27 = arith.constant 0 : index
    %38 = vector.load %arg12[%c0_26, %c0_27] : memref<1x128xf32, #tpu.memory_space<vmem>>, vector<1x128xf32>
    %c0_28 = arith.constant 0 : index
    %c0_29 = arith.constant 0 : index
    %39 = vector.load %arg13[%c0_28, %c0_29] : memref<1x128xf32, #tpu.memory_space<vmem>>, vector<1x128xf32>
    %cst_30 = arith.constant 0.000000e+00 : f32
    %40 = vector.broadcast %cst_30 : f32 to vector<128x128xf32>
    %41 = arith.maximumf %35, %40 : vector<128x128xf32>
    %42 = vector.broadcast %36 : vector<1x128xf32> to vector<128x128xf32>
    %43 = arith.mulf %42, %41 : vector<128x128xf32>
    %cst_31 = arith.constant 0.000000e+00 : f32
    %44 = vector.broadcast %cst_31 : f32 to vector<128x128xf32>
    %45 = arith.minimumf %35, %44 : vector<128x128xf32>
    %46 = vector.broadcast %37 : vector<1x128xf32> to vector<128x128xf32>
    %47 = arith.mulf %46, %45 : vector<128x128xf32>
    %48 = arith.addf %43, %47 : vector<128x128xf32>
    %49 = math.tanh %35 : vector<128x128xf32>
    %50 = vector.broadcast %38 : vector<1x128xf32> to vector<128x128xf32>
    %51 = arith.mulf %50, %49 : vector<128x128xf32>
    %52 = arith.addf %48, %51 : vector<128x128xf32>
    %cst_32 = arith.constant 5.000000e-01 : f32
    %53 = vector.broadcast %cst_32 : f32 to vector<128x128xf32>
    %54 = arith.mulf %53, %35 : vector<128x128xf32>
    %55 = math.tanh %54 : vector<128x128xf32>
    %cst_33 = arith.constant 1.000000e+00 : f32
    %56 = vector.broadcast %cst_33 : f32 to vector<128x128xf32>
    %57 = arith.addf %55, %56 : vector<128x128xf32>
    %58 = vector.broadcast %39 : vector<1x128xf32> to vector<128x128xf32>
    %59 = arith.mulf %58, %57 : vector<128x128xf32>
    %60 = arith.addf %52, %59 : vector<128x128xf32>
    %c0_34 = arith.constant 0 : index
    %c0_35 = arith.constant 0 : index
    %61 = vector.load %arg14[%c0_34, %c0_35] : memref<128x128xf32, #tpu.memory_space<vmem>>, vector<128x128xf32>
    %cst_36 = arith.constant dense<0.000000e+00> : vector<128x128xf32>
    %62 = tpu.matmul %60, %61, %cst_36 {dimension_numbers = #tpu.dot_dimension_numbers<[1], [0], [0], [1], [0, 0, 1, 1], [], []>} : vector<128x128xf32>, vector<128x128xf32>, vector<128x128xf32> -> vector<128x128xf32>
    %c0_37 = arith.constant 0 : index
    %c0_38 = arith.constant 0 : index
    %63 = vector.load %arg15[%c0_37, %c0_38] : memref<128x128xf32, #tpu.memory_space<vmem>>, vector<128x128xf32>
    tpu.vector_store %arg15[%c0_37, %c0_38], %62 {strides = array<i32>} : memref<128x128xf32, #tpu.memory_space<vmem>>, vector<128x128xf32>,
    return
  }
  func.func @transform_0(%arg0: i32) -> (i32, i32) {
    %c0_i32 = arith.constant 0 : i32
    %c0_i32_0 = arith.constant 0 : i32
    return %arg0, %c0_i32 : i32, i32
  }
  func.func @transform_1(%arg0: i32) -> (i32, i32) {
    %c0_i32 = arith.constant 0 : i32
    %c0_i32_0 = arith.constant 0 : i32
    %c0_i32_1 = arith.constant 0 : i32
    return %c0_i32, %c0_i32_0 : i32, i32
  }
  func.func @transform_2(%arg0: i32) -> (i32, i32) {
    %c0_i32 = arith.constant 0 : i32
    %c0_i32_0 = arith.constant 0 : i32
    %c0_i32_1 = arith.constant 0 : i32
    return %c0_i32, %c0_i32_0 : i32, i32
  }
  func.func @transform_3(%arg0: i32) -> (i32, i32) {
    %c0_i32 = arith.constant 0 : i32
    %c0_i32_0 = arith.constant 0 : i32
    %c0_i32_1 = arith.constant 0 : i32
    return %c0_i32, %c0_i32_0 : i32, i32
  }
  func.func @transform_4(%arg0: i32) -> (i32, i32) {
    %c0_i32 = arith.constant 0 : i32
    %c0_i32_0 = arith.constant 0 : i32
    %c0_i32_1 = arith.constant 0 : i32
    return %c0_i32, %c0_i32_0 : i32, i32
  }
  func.func @transform_5(%arg0: i32) -> (i32, i32) {
    %c0_i32 = arith.constant 0 : i32
    %c0_i32_0 = arith.constant 0 : i32
    %c0_i32_1 = arith.constant 0 : i32
    return %c0_i32, %c0_i32_0 : i32, i32
  }
  func.func @transform_6(%arg0: i32) -> (i32, i32) {
    %c0_i32 = arith.constant 0 : i32
    %c0_i32_0 = arith.constant 0 : i32
    %c0_i32_1 = arith.constant 0 : i32
    return %c0_i32, %c0_i32_0 : i32, i32
  }
  func.func @transform_7(%arg0: i32) -> (i32, i32) {
    %c0_i32 = arith.constant 0 : i32
    %c0_i32_0 = arith.constant 0 : i32
    %c0_i32_1 = arith.constant 0 : i32
    return %c0_i32, %c0_i32_0 : i32, i32
  }
  func.func @transform_8(%arg0: i32) -> (i32, i32) {
    %c0_i32 = arith.constant 0 : i32
    %c0_i32_0 = arith.constant 0 : i32
    %c0_i32_1 = arith.constant 0 : i32
    return %c0_i32, %c0_i32_0 : i32, i32
  }
  func.func @transform_9(%arg0: i32) -> (i32, i32) {
    %c0_i32 = arith.constant 0 : i32
    %c0_i32_0 = arith.constant 0 : i32
    %c0_i32_1 = arith.constant 0 : i32
    return %c0_i32, %c0_i32_0 : i32, i32
  }
  func.func @transform_10(%arg0: i32) -> (i32, i32) {
    %c0_i32 = arith.constant 0 : i32
    %c0_i32_0 = arith.constant 0 : i32
    %c0_i32_1 = arith.constant 0 : i32
    return %c0_i32, %c0_i32_0 : i32, i32
  }
  func.func @transform_11(%arg0: i32) -> (i32, i32) {
    %c0_i32 = arith.constant 0 : i32
    %c0_i32_0 = arith.constant 0 : i32
    %c0_i32_1 = arith.constant 0 : i32
    return %c0_i32, %c0_i32_0 : i32, i32
  }
  func.func @transform_12(%arg0: i32) -> (i32, i32) {
    %c0_i32 = arith.constant 0 : i32
    %c0_i32_0 = arith.constant 0 : i32
    %c0_i32_1 = arith.constant 0 : i32
    return %c0_i32, %c0_i32_0 : i32, i32
  }
  func.func @transform_13(%arg0: i32) -> (i32, i32) {
    %c0_i32 = arith.constant 0 : i32
    %c0_i32_0 = arith.constant 0 : i32
    %c0_i32_1 = arith.constant 0 : i32
    return %c0_i32, %c0_i32_0 : i32, i32
  }
  func.func @transform_14(%arg0: i32) -> (i32, i32) {
    %c0_i32 = arith.constant 0 : i32
    %c0_i32_0 = arith.constant 0 : i32
    return %arg0, %c0_i32 : i32, i32
  }
}

</mosaic_0001>

<llo_original>
// kernel: tpu_custom_call.1
$region0: #{tpu_custom_call.1}
  #allocation0 [shape = 'u32[]', space=smem, size = 0x4, offset = 0x4, fixed_abs, tag = 'smem constant byte address 0x4 - core index']
  #allocation1 [shape = 'u32[72,128]{1,0:T(1,128)}', space=vmem, size = 0x9000, scoped, tag = 'internal scratch']
  %s0 = inlined_call_operand.hbm [shape: f32[256,128], index: 0, kind: input, shape index: {}]
  %s1 = inlined_call_operand.hbm [shape: f32[128,128], index: 1, kind: input, shape index: {}]
  %s2 = inlined_call_operand.vmem [shape: f32[1,128], index: 2, kind: input, shape index: {}]
  %s3 = inlined_call_operand.vmem [shape: f32[1,128], index: 3, kind: input, shape index: {}]
  %s4 = inlined_call_operand.vmem [shape: f32[1,128], index: 4, kind: input, shape index: {}]
  %s5 = inlined_call_operand.vmem [shape: f32[1,128], index: 5, kind: input, shape index: {}]
  %s6 = inlined_call_operand.vmem [shape: f32[1,128], index: 6, kind: input, shape index: {}]
  %s7 = inlined_call_operand.hbm [shape: f32[128,128], index: 7, kind: input, shape index: {}]
  %s8 = inlined_call_operand.vmem [shape: f32[1,128], index: 8, kind: input, shape index: {}]
  %s9 = inlined_call_operand.vmem [shape: f32[1,128], index: 9, kind: input, shape index: {}]
  %s10 = inlined_call_operand.vmem [shape: f32[1,128], index: 10, kind: input, shape index: {}]
  %s11 = inlined_call_operand.vmem [shape: f32[1,128], index: 11, kind: input, shape index: {}]
  %s12 = inlined_call_operand.vmem [shape: f32[1,128], index: 12, kind: input, shape index: {}]
  %s13 = inlined_call_operand.hbm [shape: f32[128,128], index: 13, kind: input, shape index: {}]
  %s14 = inlined_call_operand.hbm [shape: f32[256,128], index: 14, kind: output, shape index: {}]
  %s15 = sld [smem:[#allocation0]]
  $region105: #{tpu_custom_call.1} parent=0
    _
  %s17 = ssub.s32 1, %s15
  %s18 = scalar_select 0, %s17, %s15
  $region1: #{tpu_custom_call.1} parent=0
    #allocation2 [shape = 'u8[131072]{0}', space=vmem, size = 0x20000, scoped, tag = 'input window, operand 0']
    #allocation3 [shape = 's32[2]{0}', space=sflag, size = 0x8, scoped, tag = 'scoped memory for tpu_custom_call.1']
    #allocation4 [shape = 's32[2]{0}', space=sflag, size = 0x8, scoped, tag = 'scoped memory for tpu_custom_call.1']
    #allocation5 [shape = 'u8[65536]{0}', space=vmem, size = 0x10000, scoped, tag = 'input window, operand 1, single buffered']
    #allocation6 [shape = 's32[1]{0}', space=sflag, size = 0x4, scoped, tag = 'scoped memory for tpu_custom_call.1']
    #allocation7 [shape = 'u8[65536]{0}', space=vmem, size = 0x10000, scoped, tag = 'input window, operand 7, single buffered']
    #allocation8 [shape = 'u8[65536]{0}', space=vmem, size = 0x10000, scoped, tag = 'input window, operand 13, single buffered']
    #allocation9 [shape = 's32[1]{0}', space=sflag, size = 0x4, scoped, tag = 'scoped memory for tpu_custom_call.1']
    #allocation10 [shape = 'u8[131072]{0}', space=vmem, size = 0x20000, scoped, tag = 'output window, operand 0']
    %19 = vsyncpa [#allocation3], 0
    %s20 = scalar_lea.sflag [#allocation3], 1
    %21 = vsyncpa %s20, 0
    %22 = vsyncpa [#allocation6], 0
    %23 = vsyncpa [#allocation9], 0
    %24 = vsyncpa [#allocation4], 0
    %s25 = scalar_lea.sflag [#allocation4], 1
    %26 = vsyncpa %s25, 0
    loop: start=0, step=1, limit=4
    $region2: #{tpu_custom_call.1} parent=1 // loop_pre_header
      _
    $region3: #{tpu_custom_call.1} parent=1 // loop_header
      %s28 = sphi 0, %s32
      %p29 = scmp.ge.s32.totalorder %s28, 4
      %s38 = sphi 0, %s40
      %s41 = sphi 0, %s38
      %s42 = sphi 0, %s41
      %s58 = sphi 0, %s42
      %s62 = sphi 0, %s62
      %s64 = sphi 0, %s62
      %s65 = sphi 0, %s64
      %s79 = sphi 0, %s65
      %s83 = sphi 0, %s83
      %s85 = sphi 0, %s83
      %s86 = sphi 0, %s85
      %s100 = sphi 0, %s86
      %s104 = sphi 0, %s104
      %s106 = sphi 0, %s104
      %s107 = sphi 0, %s106
      %s121 = sphi 0, %s107
      %s125 = sphi 0, %s125
      %s127 = sphi 0, %s125
      %s128 = sphi 0, %s127
      %s142 = sphi 0, %s128
      %s146 = sphi 0, %s146
      %s148 = sphi 0, %s146
      %s149 = sphi 0, %s148
      %s163 = sphi 0, %s149
      %s167 = sphi 0, %s167
      %s169 = sphi 0, %s167
      %s170 = sphi 0, %s169
      %s184 = sphi 0, %s170
      %s188 = sphi 0, %s188
      %s190 = sphi 0, %s188
      %s191 = sphi 0, %s190
      %s205 = sphi 0, %s191
      %s209 = sphi 0, %s209
      %s211 = sphi 0, %s209
      %s212 = sphi 0, %s211
      %s226 = sphi 0, %s212
      %s230 = sphi 0, %s230
      %s232 = sphi 0, %s230
      %s233 = sphi 0, %s232
      %s247 = sphi 0, %s233
      %s251 = sphi 0, %s251
      %s253 = sphi 0, %s251
      %s254 = sphi 0, %s253
      %s268 = sphi 0, %s254
      %s272 = sphi 0, %s272
      %s274 = sphi 0, %s272
      %s275 = sphi 0, %s274
      %s289 = sphi 0, %s275
      %s293 = sphi 0, %s293
      %s295 = sphi 0, %s293
      %s296 = sphi 0, %s295
      %s310 = sphi 0, %s296
      %s314 = sphi 0, %s314
      %s316 = sphi 0, %s314
      %s317 = sphi 0, %s316
      %s331 = sphi 0, %s317
      %s337 = sphi 0, %s339
      %s340 = sphi 0, %s337
      %s341 = sphi 0, %s340
      %s357 = sphi 0, %s341
    $region4: #{tpu_custom_call.1} parent=1 // loop_header_branch
      %31 = sbr.rel (%p29) target = $region8
    $region5: #{tpu_custom_call.1} parent=1 // loop_body
      %s33 = ssub.s32 %s28, 1
      %s34 = ssub.s32 %s28, 2
      %s35 = sadd.s32 %s28, 1
      %s36 = ssub.s32 %s28, %s35
      %p37 = scmp.eq.s32.totalorder %s36, 0
      %s39 = sadd.s32 %s38, 1
      %s40 = scalar_select %p37, %s38, %s39
      %p43 = pneg %p37
      %p44 = scmp.eq.s32.totalorder %s28, 1
      %p45 = por %p43, %p44
      %p46 = scmp.ne.s32.totalorder %s38, %s41
      %p47 = scmp.eq.s32.totalorder %s28, 0
      %p48 = por %p46, %p47
      %p49 = scmp.ne.s32.totalorder %s38, %s41
      %p50 = scmp.eq.s32.totalorder %s33, 1
      %p51 = por %p49, %p50
      %p52 = scmp.ne.s32.totalorder %s41, %s42
      %p53 = scmp.eq.s32.totalorder %s33, 0
      %p54 = por %p52, %p53
      %p55 = scmp.ne.s32.totalorder %s41, %s42
      %p56 = scmp.eq.s32.totalorder %s34, 1
      %p57 = por %p55, %p56
      %p59 = scmp.ne.s32.totalorder %s42, %s58
      %p60 = scmp.eq.s32.totalorder %s34, 0
      %p61 = por %p59, %p60
      %s63 = sadd.s32 %s62, 1
      %p66 = scmp.eq.s32.totalorder %s28, 1
      %p67 = scmp.ne.s32.totalorder %s62, %s64
      %p68 = scmp.eq.s32.totalorder %s28, 0
      %p69 = por %p67, %p68
      %p70 = scmp.ne.s32.totalorder %s62, %s64
      %p71 = scmp.eq.s32.totalorder %s33, 1
      %p72 = por %p70, %p71
      %p73 = scmp.ne.s32.totalorder %s64, %s65
      %p74 = scmp.eq.s32.totalorder %s33, 0
      %p75 = por %p73, %p74
      %p76 = scmp.ne.s32.totalorder %s64, %s65
      %p77 = scmp.eq.s32.totalorder %s34, 1
      %p78 = por %p76, %p77
      %p80 = scmp.ne.s32.totalorder %s65, %s79
      %p81 = scmp.eq.s32.totalorder %s34, 0
      %p82 = por %p80, %p81
      %s84 = sadd.s32 %s83, 1
      %p87 = scmp.eq.s32.totalorder %s28, 1
      %p88 = scmp.ne.s32.totalorder %s83, %s85
      %p89 = scmp.eq.s32.totalorder %s28, 0
      %p90 = por %p88, %p89
      %p91 = scmp.ne.s32.totalorder %s83, %s85
      %p92 = scmp.eq.s32.totalorder %s33, 1
      %p93 = por %p91, %p92
      %p94 = scmp.ne.s32.totalorder %s85, %s86
      %p95 = scmp.eq.s32.totalorder %s33, 0
      %p96 = por %p94, %p95
      %p97 = scmp.ne.s32.totalorder %s85, %s86
      %p98 = scmp.eq.s32.totalorder %s34, 1
      %p99 = por %p97, %p98
      %p101 = scmp.ne.s32.totalorder %s86, %s100
      %p102 = scmp.eq.s32.totalorder %s34, 0
      %p103 = por %p101, %p102
      %s105 = sadd.s32 %s104, 1
      %p108 = scmp.eq.s32.totalorder %s28, 1
      %p109 = scmp.ne.s32.totalorder %s104, %s106
      %p110 = scmp.eq.s32.totalorder %s28, 0
      %p111 = por %p109, %p110
      %p112 = scmp.ne.s32.totalorder %s104, %s106
      %p113 = scmp.eq.s32.totalorder %s33, 1
      %p114 = por %p112, %p113
      %p115 = scmp.ne.s32.totalorder %s106, %s107
      %p116 = scmp.eq.s32.totalorder %s33, 0
      %p117 = por %p115, %p116
      %p118 = scmp.ne.s32.totalorder %s106, %s107
      %p119 = scmp.eq.s32.totalorder %s34, 1
      %p120 = por %p118, %p119
      %p122 = scmp.ne.s32.totalorder %s107, %s121
      %p123 = scmp.eq.s32.totalorder %s34, 0
      %p124 = por %p122, %p123
      %s126 = sadd.s32 %s125, 1
      %p129 = scmp.eq.s32.totalorder %s28, 1
      %p130 = scmp.ne.s32.totalorder %s125, %s127
      %p131 = scmp.eq.s32.totalorder %s28, 0
      %p132 = por %p130, %p131
      %p133 = scmp.ne.s32.totalorder %s125, %s127
      %p134 = scmp.eq.s32.totalorder %s33, 1
      %p135 = por %p133, %p134
      %p136 = scmp.ne.s32.totalorder %s127, %s128
      %p137 = scmp.eq.s32.totalorder %s33, 0
      %p138 = por %p136, %p137
      %p139 = scmp.ne.s32.totalorder %s127, %s128
      %p140 = scmp.eq.s32.totalorder %s34, 1
      %p141 = por %p139, %p140
      %p143 = scmp.ne.s32.totalorder %s128, %s142
      %p144 = scmp.eq.s32.totalorder %s34, 0
      %p145 = por %p143, %p144
      %s147 = sadd.s32 %s146, 1
      %p150 = scmp.eq.s32.totalorder %s28, 1
      %p151 = scmp.ne.s32.totalorder %s146, %s148
      %p152 = scmp.eq.s32.totalorder %s28, 0
      %p153 = por %p151, %p152
      %p154 = scmp.ne.s32.totalorder %s146, %s148
      %p155 = scmp.eq.s32.totalorder %s33, 1
      %p156 = por %p154, %p155
      %p157 = scmp.ne.s32.totalorder %s148, %s149
      %p158 = scmp.eq.s32.totalorder %s33, 0
      %p159 = por %p157, %p158
      %p160 = scmp.ne.s32.totalorder %s148, %s149
      %p161 = scmp.eq.s32.totalorder %s34, 1
      %p162 = por %p160, %p161
      %p164 = scmp.ne.s32.totalorder %s149, %s163
      %p165 = scmp.eq.s32.totalorder %s34, 0
      %p166 = por %p164, %p165
      %s168 = sadd.s32 %s167, 1
      %p171 = scmp.eq.s32.totalorder %s28, 1
      %p172 = scmp.ne.s32.totalorder %s167, %s169
      %p173 = scmp.eq.s32.totalorder %s28, 0
      %p174 = por %p172, %p173
      %p175 = scmp.ne.s32.totalorder %s167, %s169
      %p176 = scmp.eq.s32.totalorder %s33, 1
      %p177 = por %p175, %p176
      %p178 = scmp.ne.s32.totalorder %s169, %s170
      %p179 = scmp.eq.s32.totalorder %s33, 0
      %p180 = por %p178, %p179
      %p181 = scmp.ne.s32.totalorder %s169, %s170
      %p182 = scmp.eq.s32.totalorder %s34, 1
      %p183 = por %p181, %p182
      %p185 = scmp.ne.s32.totalorder %s170, %s184
      %p186 = scmp.eq.s32.totalorder %s34, 0
      %p187 = por %p185, %p186
      %s189 = sadd.s32 %s188, 1
      %p192 = scmp.eq.s32.totalorder %s28, 1
      %p193 = scmp.ne.s32.totalorder %s188, %s190
      %p194 = scmp.eq.s32.totalorder %s28, 0
      %p195 = por %p193, %p194
      %p196 = scmp.ne.s32.totalorder %s188, %s190
      %p197 = scmp.eq.s32.totalorder %s33, 1
      %p198 = por %p196, %p197
      %p199 = scmp.ne.s32.totalorder %s190, %s191
      %p200 = scmp.eq.s32.totalorder %s33, 0
      %p201 = por %p199, %p200
      %p202 = scmp.ne.s32.totalorder %s190, %s191
      %p203 = scmp.eq.s32.totalorder %s34, 1
      %p204 = por %p202, %p203
      %p206 = scmp.ne.s32.totalorder %s191, %s205
      %p207 = scmp.eq.s32.totalorder %s34, 0
      %p208 = por %p206, %p207
      %s210 = sadd.s32 %s209, 1
      %p213 = scmp.eq.s32.totalorder %s28, 1
      %p214 = scmp.ne.s32.totalorder %s209, %s211
      %p215 = scmp.eq.s32.totalorder %s28, 0
      %p216 = por %p214, %p215
      %p217 = scmp.ne.s32.totalorder %s209, %s211
      %p218 = scmp.eq.s32.totalorder %s33, 1
      %p219 = por %p217, %p218
      %p220 = scmp.ne.s32.totalorder %s211, %s212
      %p221 = scmp.eq.s32.totalorder %s33, 0
      %p222 = por %p220, %p221
      %p223 = scmp.ne.s32.totalorder %s211, %s212
      %p224 = scmp.eq.s32.totalorder %s34, 1
      %p225 = por %p223, %p224
      %p227 = scmp.ne.s32.totalorder %s212, %s226
      %p228 = scmp.eq.s32.totalorder %s34, 0
      %p229 = por %p227, %p228
      %s231 = sadd.s32 %s230, 1
      %p234 = scmp.eq.s32.totalorder %s28, 1
      %p235 = scmp.ne.s32.totalorder %s230, %s232
      %p236 = scmp.eq.s32.totalorder %s28, 0
      %p237 = por %p235, %p236
      %p238 = scmp.ne.s32.totalorder %s230, %s232
      %p239 = scmp.eq.s32.totalorder %s33, 1
      %p240 = por %p238, %p239
      %p241 = scmp.ne.s32.totalorder %s232, %s233
      %p242 = scmp.eq.s32.totalorder %s33, 0
      %p243 = por %p241, %p242
      %p244 = scmp.ne.s32.totalorder %s232, %s233
      %p245 = scmp.eq.s32.totalorder %s34, 1
      %p246 = por %p244, %p245
      %p248 = scmp.ne.s32.totalorder %s233, %s247
      %p249 = scmp.eq.s32.totalorder %s34, 0
      %p250 = por %p248, %p249
      %s252 = sadd.s32 %s251, 1
      %p255 = scmp.eq.s32.totalorder %s28, 1
      %p256 = scmp.ne.s32.totalorder %s251, %s253
      %p257 = scmp.eq.s32.totalorder %s28, 0
      %p258 = por %p256, %p257
      %p259 = scmp.ne.s32.totalorder %s251, %s253
      %p260 = scmp.eq.s32.totalorder %s33, 1
      %p261 = por %p259, %p260
      %p262 = scmp.ne.s32.totalorder %s253, %s254
      %p263 = scmp.eq.s32.totalorder %s33, 0
      %p264 = por %p262, %p263
      %p265 = scmp.ne.s32.totalorder %s253, %s254
      %p266 = scmp.eq.s32.totalorder %s34, 1
      %p267 = por %p265, %p266
      %p269 = scmp.ne.s32.totalorder %s254, %s268
      %p270 = scmp.eq.s32.totalorder %s34, 0
      %p271 = por %p269, %p270
      %s273 = sadd.s32 %s272, 1
      %p276 = scmp.eq.s32.totalorder %s28, 1
      %p277 = scmp.ne.s32.totalorder %s272, %s274
      %p278 = scmp.eq.s32.totalorder %s28, 0
      %p279 = por %p277, %p278
      %p280 = scmp.ne.s32.totalorder %s272, %s274
      %p281 = scmp.eq.s32.totalorder %s33, 1
      %p282 = por %p280, %p281
      %p283 = scmp.ne.s32.totalorder %s274, %s275
      %p284 = scmp.eq.s32.totalorder %s33, 0
      %p285 = por %p283, %p284
      %p286 = scmp.ne.s32.totalorder %s274, %s275
      %p287 = scmp.eq.s32.totalorder %s34, 1
      %p288 = por %p286, %p287
      %p290 = scmp.ne.s32.totalorder %s275, %s289
      %p291 = scmp.eq.s32.totalorder %s34, 0
      %p292 = por %p290, %p291
      %s294 = sadd.s32 %s293, 1
      %p297 = scmp.eq.s32.totalorder %s28, 1
      %p298 = scmp.ne.s32.totalorder %s293, %s295
      %p299 = scmp.eq.s32.totalorder %s28, 0
      %p300 = por %p298, %p299
      %p301 = scmp.ne.s32.totalorder %s293, %s295
      %p302 = scmp.eq.s32.totalorder %s33, 1
      %p303 = por %p301, %p302
      %p304 = scmp.ne.s32.totalorder %s295, %s296
      %p305 = scmp.eq.s32.totalorder %s33, 0
      %p306 = por %p304, %p305
      %p307 = scmp.ne.s32.totalorder %s295, %s296
      %p308 = scmp.eq.s32.totalorder %s34, 1
      %p309 = por %p307, %p308
      %p311 = scmp.ne.s32.totalorder %s296, %s310
      %p312 = scmp.eq.s32.totalorder %s34, 0
      %p313 = por %p311, %p312
      %s315 = sadd.s32 %s314, 1
      %p318 = scmp.eq.s32.totalorder %s28, 1
      %p319 = scmp.ne.s32.totalorder %s314, %s316
      %p320 = scmp.eq.s32.totalorder %s28, 0
      %p321 = por %p319, %p320
      %p322 = scmp.ne.s32.totalorder %s314, %s316
      %p323 = scmp.eq.s32.totalorder %s33, 1
      %p324 = por %p322, %p323
      %p325 = scmp.ne.s32.totalorder %s316, %s317
      %p326 = scmp.eq.s32.totalorder %s33, 0
      %p327 = por %p325, %p326
      %p328 = scmp.ne.s32.totalorder %s316, %s317
      %p329 = scmp.eq.s32.totalorder %s34, 1
      %p330 = por %p328, %p329
      %p332 = scmp.ne.s32.totalorder %s317, %s331
      %p333 = scmp.eq.s32.totalorder %s34, 0
      %p334 = por %p332, %p333
      %s335 = ssub.s32 %s28, %s35
      %p336 = scmp.eq.s32.totalorder %s335, 0
      %s338 = sadd.s32 %s337, 1
      %s339 = scalar_select %p336, %s337, %s338
      %p342 = pneg %p336
      %p343 = scmp.eq.s32.totalorder %s28, 1
      %p344 = por %p342, %p343
      %p345 = scmp.ne.s32.totalorder %s337, %s340
      %p346 = scmp.eq.s32.totalorder %s28, 0
      %p347 = por %p345, %p346
      %p348 = scmp.ne.s32.totalorder %s337, %s340
      %p349 = scmp.eq.s32.totalorder %s33, 1
      %p350 = por %p348, %p349
      %p351 = scmp.ne.s32.totalorder %s340, %s341
      %p352 = scmp.eq.s32.totalorder %s33, 0
      %p353 = por %p351, %p352
      %p354 = scmp.ne.s32.totalorder %s340, %s341
      %p355 = scmp.eq.s32.totalorder %s34, 1
      %p356 = por %p354, %p355
      %p358 = scmp.ne.s32.totalorder %s341, %s357
      %p359 = scmp.eq.s32.totalorder %s34, 0
      %p360 = por %p358, %p359
      %p361 = scmp.le.s32.totalorder 1, %s28
      %p362 = scmp.lt.s32.totalorder %s28, 3
      %p363 = pnand %p361, %p362
      %p364 = pneg %p363
      // Predicated region
      $region9: #{tpu_custom_call.1} parent=5 // pred_check
        _
      $region10: #{tpu_custom_call.1} parent=5 // pred_check_branch
        %366 = sbr.rel (%p363) target = $region12
      $region11: #{tpu_custom_call.1} parent=5 // pred_region
        %s367 = ssub.s32 %s28, 1
        // Predicated region
        $region13: #{tpu_custom_call.1} parent=11 // pred_check
          %p368 = pneg %p75
        $region14: #{tpu_custom_call.1} parent=11 // pred_check_branch
          %370 = sbr.rel (%p368) target = $region16
        $region15: #{tpu_custom_call.1} parent=11 // pred_region
          %372 = vsyncadd [#allocation6], 0
          %s373 = sshll.u32 %s1, 4
          %s374 = int_to_ptr.hbm [resolvable:$true] %s373
          %s375 = sshll.u32 [#allocation5], 4
          %s376 = int_to_ptr.vmem [resolvable:$true] %s375
          %381 = dma.hbm_to_vmem [thread:$0]  %s374, 2048, %s376, [#allocation6], 128, 128, 8
        $region16: #{tpu_custom_call.1} parent=11 // pred_fallthru
          _
        // Predicated region
        $region17: #{tpu_custom_call.1} parent=11 // pred_check
          %p382 = pneg %p96
        $region18: #{tpu_custom_call.1} parent=11 // pred_check_branch
          %384 = sbr.rel (%p382) target = $region20
        $region19: #{tpu_custom_call.1} parent=11 // pred_region
          _
        $region20: #{tpu_custom_call.1} parent=11 // pred_fallthru
          _
        // Predicated region
        $region21: #{tpu_custom_call.1} parent=11 // pred_check
          %p385 = pneg %p117
        $region22: #{tpu_custom_call.1} parent=11 // pred_check_branch
          %387 = sbr.rel (%p385) target = $region24
        $region23: #{tpu_custom_call.1} parent=11 // pred_region
          _
        $region24: #{tpu_custom_call.1} parent=11 // pred_fallthru
          _
        // Predicated region
        $region25: #{tpu_custom_call.1} parent=11 // pred_check
          %p388 = pneg %p138
        $region26: #{tpu_custom_call.1} parent=11 // pred_check_branch
          %390 = sbr.rel (%p388) target = $region28
        $region27: #{tpu_custom_call.1} parent=11 // pred_region
          _
        $region28: #{tpu_custom_call.1} parent=11 // pred_fallthru
          _
        // Predicated region
        $region29: #{tpu_custom_call.1} parent=11 // pred_check
          %p391 = pneg %p159
        $region30: #{tpu_custom_call.1} parent=11 // pred_check_branch
          %393 = sbr.rel (%p391) target = $region32
        $region31: #{tpu_custom_call.1} parent=11 // pred_region
          _
        $region32: #{tpu_custom_call.1} parent=11 // pred_fallthru
          _
        // Predicated region
        $region33: #{tpu_custom_call.1} parent=11 // pred_check
          %p394 = pneg %p180
        $region34: #{tpu_custom_call.1} parent=11 // pred_check_branch
          %396 = sbr.rel (%p394) target = $region36
        $region35: #{tpu_custom_call.1} parent=11 // pred_region
          _
        $region36: #{tpu_custom_call.1} parent=11 // pred_fallthru
          _
        // Predicated region
        $region37: #{tpu_custom_call.1} parent=11 // pred_check
          %p397 = pneg %p201
        $region38: #{tpu_custom_call.1} parent=11 // pred_check_branch
          %399 = sbr.rel (%p397) target = $region40
        $region39: #{tpu_custom_call.1} parent=11 // pred_region
          %401 = vsyncadd [#allocation6], 0
          %s402 = sshll.u32 %s7, 4
          %s403 = int_to_ptr.hbm [resolvable:$true] %s402
          %s404 = sshll.u32 [#allocation7], 4
          %s405 = int_to_ptr.vmem [resolvable:$true] %s404
          %410 = dma.hbm_to_vmem [thread:$0]  %s403, 2048, %s405, [#allocation6], 128, 128, 8
        $region40: #{tpu_custom_call.1} parent=11 // pred_fallthru
          _
        // Predicated region
        $region41: #{tpu_custom_call.1} parent=11 // pred_check
          %p411 = pneg %p222
        $region42: #{tpu_custom_call.1} parent=11 // pred_check_branch
          %413 = sbr.rel (%p411) target = $region44
        $region43: #{tpu_custom_call.1} parent=11 // pred_region
          _
        $region44: #{tpu_custom_call.1} parent=11 // pred_fallthru
          _
        // Predicated region
        $region45: #{tpu_custom_call.1} parent=11 // pred_check
          %p414 = pneg %p243
        $region46: #{tpu_custom_call.1} parent=11 // pred_check_branch
          %416 = sbr.rel (%p414) target = $region48
        $region47: #{tpu_custom_call.1} parent=11 // pred_region
          _
        $region48: #{tpu_custom_call.1} parent=11 // pred_fallthru
          _
        // Predicated region
        $region49: #{tpu_custom_call.1} parent=11 // pred_check
          %p417 = pneg %p264
        $region50: #{tpu_custom_call.1} parent=11 // pred_check_branch
          %419 = sbr.rel (%p417) target = $region52
        $region51: #{tpu_custom_call.1} parent=11 // pred_region
          _
        $region52: #{tpu_custom_call.1} parent=11 // pred_fallthru
          _
        // Predicated region
        $region53: #{tpu_custom_call.1} parent=11 // pred_check
          %p420 = pneg %p285
        $region54: #{tpu_custom_call.1} parent=11 // pred_check_branch
          %422 = sbr.rel (%p420) target = $region56
        $region55: #{tpu_custom_call.1} parent=11 // pred_region
          _
        $region56: #{tpu_custom_call.1} parent=11 // pred_fallthru
          _
        // Predicated region
        $region57: #{tpu_custom_call.1} parent=11 // pred_check
          %p423 = pneg %p306
        $region58: #{tpu_custom_call.1} parent=11 // pred_check_branch
          %425 = sbr.rel (%p423) target = $region60
        $region59: #{tpu_custom_call.1} parent=11 // pred_region
          _
        $region60: #{tpu_custom_call.1} parent=11 // pred_fallthru
          _
        // Predicated region
        $region61: #{tpu_custom_call.1} parent=11 // pred_check
          %p426 = pneg %p327
        $region62: #{tpu_custom_call.1} parent=11 // pred_check_branch
          %428 = sbr.rel (%p426) target = $region64
        $region63: #{tpu_custom_call.1} parent=11 // pred_region
          %430 = vsyncadd [#allocation9], 0
          %s431 = sshll.u32 %s13, 4
          %s432 = int_to_ptr.hbm [resolvable:$true] %s431
          %s433 = sshll.u32 [#allocation8], 4
          %s434 = int_to_ptr.vmem [resolvable:$true] %s433
          %439 = dma.hbm_to_vmem [thread:$0]  %s432, 2048, %s434, [#allocation9], 128, 128, 8
        $region64: #{tpu_custom_call.1} parent=11 // pred_fallthru
          _
      $region12: #{tpu_custom_call.1} parent=5 // pred_fallthru
        _
      %p440 = scmp.lt.s32.totalorder %s28, 2
      // Predicated region
      $region65: #{tpu_custom_call.1} parent=5 // pred_check
        %p441 = pneg %p440
      $region66: #{tpu_custom_call.1} parent=5 // pred_check_branch
        %443 = sbr.rel (%p441) target = $region68
      $region67: #{tpu_custom_call.1} parent=5 // pred_region
        // Predicated region
        $region69: #{tpu_custom_call.1} parent=67 // pred_check
          %p444 = pneg %p48
        $region70: #{tpu_custom_call.1} parent=67 // pred_check_branch
          %446 = sbr.rel (%p444) target = $region72
        $region71: #{tpu_custom_call.1} parent=67 // pred_region
          %s447 = sand.u32 %s38, 1
          %s448 = scalar_lea.sflag [#allocation3], %s447
          %s449 = sand.u32 %s38, 1
          %s450 = smul.addr %s449, 128
          %s451 = scalar_lea.vmem [#allocation2], %s450
          %s452 = smul.u32 16, %s28
          %454 = vsyncadd %s448, 0
          %s455 = smul.addr %s452, 8
          %s456 = scalar_lea.hbm %s0, %s455
          %s457 = sshll.u32 %s456, 4
          %s458 = int_to_ptr.hbm [resolvable:$true] %s457
          %s459 = sshll.u32 %s451, 4
          %s460 = int_to_ptr.vmem [resolvable:$true] %s459
          %465 = dma.hbm_to_vmem [thread:$0]  %s458, 2048, %s460, %s448, 128, 128, 8
        $region72: #{tpu_custom_call.1} parent=67 // pred_fallthru
          _
      $region68: #{tpu_custom_call.1} parent=5 // pred_fallthru
        _
      %p466 = scmp.le.s32.totalorder 1, %s28
      %p467 = scmp.lt.s32.totalorder %s28, 3
      %p468 = pnand %p466, %p467
      %p469 = pneg %p468
      // Predicated region
      $region73: #{tpu_custom_call.1} parent=5 // pred_check
        _
      $region74: #{tpu_custom_call.1} parent=5 // pred_check_branch
        %471 = sbr.rel (%p468) target = $region76
      $region75: #{tpu_custom_call.1} parent=5 // pred_region
        %s472 = ssub.s32 %s28, 1
        %s473 = sand.u32 %s41, 1
        %s474 = scalar_lea.sflag [#allocation3], %s473
        %s475 = sand.u32 %s41, 1
        %s476 = smul.addr %s475, 128
        %s477 = scalar_lea.vmem [#allocation2], %s476
        // Predicated region
        $region77: #{tpu_custom_call.1} parent=75 // pred_check
          %p478 = pneg %p54
        $region78: #{tpu_custom_call.1} parent=75 // pred_check_branch
          %480 = sbr.rel (%p478) target = $region80
        $region79: #{tpu_custom_call.1} parent=75 // pred_region
          %482 = dma.done %s474, 2048
        $region80: #{tpu_custom_call.1} parent=75 // pred_fallthru
          _
        // Predicated region
        $region81: #{tpu_custom_call.1} parent=75 // pred_check
          %p483 = pneg %p75
        $region82: #{tpu_custom_call.1} parent=75 // pred_check_branch
          %485 = sbr.rel (%p483) target = $region84
        $region83: #{tpu_custom_call.1} parent=75 // pred_region
          %487 = dma.done [#allocation6], 2048
        $region84: #{tpu_custom_call.1} parent=75 // pred_fallthru
          _
        // Predicated region
        $region85: #{tpu_custom_call.1} parent=75 // pred_check
          %p488 = pneg %p201
        $region86: #{tpu_custom_call.1} parent=75 // pred_check_branch
          %490 = sbr.rel (%p488) target = $region88
        $region87: #{tpu_custom_call.1} parent=75 // pred_region
          %492 = dma.done [#allocation6], 2048
        $region88: #{tpu_custom_call.1} parent=75 // pred_fallthru
          _
        // Predicated region
        $region89: #{tpu_custom_call.1} parent=75 // pred_check
          %p493 = pneg %p327
        $region90: #{tpu_custom_call.1} parent=75 // pred_check_branch
          %495 = sbr.rel (%p493) target = $region92
        $region91: #{tpu_custom_call.1} parent=75 // pred_region
          %497 = dma.done [#allocation9], 2048
        $region92: #{tpu_custom_call.1} parent=75 // pred_fallthru
          _
        %s498 = sand.u32 %s41, 1
        %s499 = scalar_lea.sflag [#allocation3], %s498
        %s500 = sand.u32 %s41, 1
        %s501 = smul.addr %s500, 128
        %s502 = scalar_lea.vmem [#allocation2], %s501
        %p503 = pneg %p54
        %p504 = pneg %p51
        %p505 = pneg %p75
        %p506 = pneg %p72
        %p507 = pneg %p96
        %p508 = pneg %p93
        %p509 = pneg %p117
        %p510 = pneg %p114
        %p511 = pneg %p138
        %p512 = pneg %p135
        %p513 = pneg %p159
        %p514 = pneg %p156
        %p515 = pneg %p180
        %p516 = pneg %p177
        %p517 = pneg %p201
        %p518 = pneg %p198
        %p519 = pneg %p222
        %p520 = pneg %p219
        %p521 = pneg %p243
        %p522 = pneg %p240
        %p523 = pneg %p264
        %p524 = pneg %p261
        %p525 = pneg %p285
        %p526 = pneg %p282
        %p527 = pneg %p306
        %p528 = pneg %p303
        %p529 = pneg %p327
        %p530 = pneg %p324
        %p531 = pneg %p353
        %p532 = pneg %p350
        %s533 = sand.u32 %s340, 1
        %s534 = scalar_lea.sflag [#allocation4], %s533
        %s535 = sand.u32 %s340, 1
        %s536 = smul.addr %s535, 128
        %s537 = scalar_lea.vmem [#allocation10], %s536
        %s538 = smul.u32 16, %s33
        %s539 = smul.u32 16, %s33
        %v540 = vld [vmem:[%s477] sm:$0xff]
        %v541 = vld [vmem:[%s477 + $0x8] sm:$0xff]
        %v542 = vld [vmem:[%s477 + $0x10] sm:$0xff]
        %v543 = vld [vmem:[%s477 + $0x18] sm:$0xff]
        %v544 = vld [vmem:[%s477 + $0x20] sm:$0xff]
        %v545 = vld [vmem:[%s477 + $0x28] sm:$0xff]
        %v546 = vld [vmem:[%s477 + $0x30] sm:$0xff]
        %v547 = vld [vmem:[%s477 + $0x38] sm:$0xff]
        %v548 = vld [vmem:[%s477 + $0x40] sm:$0xff]
        %v549 = vld [vmem:[%s477 + $0x48] sm:$0xff]
        %v550 = vld [vmem:[%s477 + $0x50] sm:$0xff]
        %v551 = vld [vmem:[%s477 + $0x58] sm:$0xff]
        %v552 = vld [vmem:[%s477 + $0x60] sm:$0xff]
        %v553 = vld [vmem:[%s477 + $0x68] sm:$0xff]
        %v554 = vld [vmem:[%s477 + $0x70] sm:$0xff]
        %v555 = vld [vmem:[%s477 + $0x78] sm:$0xff]
        %v556 = vld [vmem:[#allocation5] sm:$0xff]
        %v557 = vld [vmem:[#allocation5 + $0x8] sm:$0xff]
        %v558 = vld [vmem:[#allocation5 + $0x10] sm:$0xff]
        %v559 = vld [vmem:[#allocation5 + $0x18] sm:$0xff]
        %v560 = vld [vmem:[#allocation5 + $0x20] sm:$0xff]
        %v561 = vld [vmem:[#allocation5 + $0x28] sm:$0xff]
        %v562 = vld [vmem:[#allocation5 + $0x30] sm:$0xff]
        %v563 = vld [vmem:[#allocation5 + $0x38] sm:$0xff]
        %v564 = vld [vmem:[#allocation5 + $0x40] sm:$0xff]
        %v565 = vld [vmem:[#allocation5 + $0x48] sm:$0xff]
        %v566 = vld [vmem:[#allocation5 + $0x50] sm:$0xff]
        %v567 = vld [vmem:[#allocation5 + $0x58] sm:$0xff]
        %v568 = vld [vmem:[#allocation5 + $0x60] sm:$0xff]
        %v569 = vld [vmem:[#allocation5 + $0x68] sm:$0xff]
        %v570 = vld [vmem:[#allocation5 + $0x70] sm:$0xff]
        %v571 = vld [vmem:[#allocation5 + $0x78] sm:$0xff]
        %v572 = vld [vmem:[%s2] sm:$0x1]
        %v574 = vperm.slane %v572, 0
        %576 = vmatpush.msra.mxu0 %v571
        %577 = vmatpush.msra.mxu0 %v570
        %578 = vmatpush.msra.mxu0 %v569
        %579 = vmatpush.msra.mxu0 %v568
        %580 = vmatpush.msra.mxu0 %v567
        %581 = vmatpush.msra.mxu0 %v566
        %582 = vmatpush.msra.mxu0 %v565
        %583 = vmatpush.msra.mxu0 %v564
        %584 = vmatpush.msra.mxu0 %v563
        %585 = vmatpush.msra.mxu0 %v562
        %586 = vmatpush.msra.mxu0 %v561
        %587 = vmatpush.msra.mxu0 %v560
        %588 = vmatpush.msra.mxu0 %v559
        %589 = vmatpush.msra.mxu0 %v558
        %590 = vmatpush.msra.mxu0 %v557
        %591 = vmatpush.msra.mxu0 %v556
        %592 = vmatmul.f32.gmra.mxu0 %v540
        %v593 = vpop.f32.mrf.mxu0
        %v594 = vadd.f32 %v574, %v593
        %595 = vmatmul.f32.gmra.mxu0 %v541
        %v596 = vpop.f32.mrf.mxu0
        %v597 = vadd.f32 %v574, %v596
        %598 = vmatmul.f32.gmra.mxu0 %v542
        %v599 = vpop.f32.mrf.mxu0
        %v600 = vadd.f32 %v574, %v599
        %601 = vmatmul.f32.gmra.mxu0 %v543
        %v602 = vpop.f32.mrf.mxu0
        %v603 = vadd.f32 %v574, %v602
        %604 = vmatmul.f32.gmra.mxu0 %v544
        %v605 = vpop.f32.mrf.mxu0
        %v606 = vadd.f32 %v574, %v605
        %607 = vmatmul.f32.gmra.mxu0 %v545
        %v608 = vpop.f32.mrf.mxu0
        %v609 = vadd.f32 %v574, %v608
        %610 = vmatmul.f32.gmra.mxu0 %v546
        %v611 = vpop.f32.mrf.mxu0
        %v612 = vadd.f32 %v574, %v611
        %613 = vmatmul.f32.gmra.mxu0 %v547
        %v614 = vpop.f32.mrf.mxu0
        %v615 = vadd.f32 %v574, %v614
        %616 = vmatmul.f32.gmra.mxu0 %v548
        %v617 = vpop.f32.mrf.mxu0
        %v618 = vadd.f32 %v574, %v617
        %619 = vmatmul.f32.gmra.mxu0 %v549
        %v620 = vpop.f32.mrf.mxu0
        %v621 = vadd.f32 %v574, %v620
        %622 = vmatmul.f32.gmra.mxu0 %v550
        %v623 = vpop.f32.mrf.mxu0
        %v624 = vadd.f32 %v574, %v623
        %625 = vmatmul.f32.gmra.mxu0 %v551
        %v626 = vpop.f32.mrf.mxu0
        %v627 = vadd.f32 %v574, %v626
        %628 = vmatmul.f32.gmra.mxu0 %v552
        %v629 = vpop.f32.mrf.mxu0
        %v630 = vadd.f32 %v574, %v629
        %631 = vmatmul.f32.gmra.mxu0 %v553
        %v632 = vpop.f32.mrf.mxu0
        %v633 = vadd.f32 %v574, %v632
        %634 = vmatmul.f32.gmra.mxu0 %v554
        %v635 = vpop.f32.mrf.mxu0
        %v636 = vadd.f32 %v574, %v635
        %637 = vmatmul.f32.gmra.mxu0 %v555
        %v638 = vpop.f32.mrf.mxu0
        %v639 = vadd.f32 %v574, %v638
        %640 = vdwg.mxu0
        %v641 = vld [vmem:[%s3] sm:$0x1]
        %v642 = vld [vmem:[%s4] sm:$0x1]
        %v643 = vld [vmem:[%s5] sm:$0x1]
        %v644 = vld [vmem:[%s6] sm:$0x1]
        %v645 = vmax.f32 %v594, 0.0
        %v646 = vmax.f32 %v597, 0.0
        %v647 = vmax.f32 %v600, 0.0
        %v648 = vmax.f32 %v603, 0.0
        %v649 = vmax.f32 %v606, 0.0
        %v650 = vmax.f32 %v609, 0.0
        %v651 = vmax.f32 %v612, 0.0
        %v652 = vmax.f32 %v615, 0.0
        %v653 = vmax.f32 %v618, 0.0
        %v654 = vmax.f32 %v621, 0.0
        %v655 = vmax.f32 %v624, 0.0
        %v656 = vmax.f32 %v627, 0.0
        %v657 = vmax.f32 %v630, 0.0
        %v658 = vmax.f32 %v633, 0.0
        %v659 = vmax.f32 %v636, 0.0
        %v660 = vmax.f32 %v639, 0.0
        %v662 = vperm.slane %v641, 0
        %v664 = vmul.f32 %v662, %v645
        %v665 = vmul.f32 %v662, %v646
        %v666 = vmul.f32 %v662, %v647
        %v667 = vmul.f32 %v662, %v648
        %v668 = vmul.f32 %v662, %v649
        %v669 = vmul.f32 %v662, %v650
        %v670 = vmul.f32 %v662, %v651
        %v671 = vmul.f32 %v662, %v652
        %v672 = vmul.f32 %v662, %v653
        %v673 = vmul.f32 %v662, %v654
        %v674 = vmul.f32 %v662, %v655
        %v675 = vmul.f32 %v662, %v656
        %v676 = vmul.f32 %v662, %v657
        %v677 = vmul.f32 %v662, %v658
        %v678 = vmul.f32 %v662, %v659
        %v679 = vmul.f32 %v662, %v660
        %v680 = vmin.f32 %v594, 0.0
        %v681 = vmin.f32 %v597, 0.0
        %v682 = vmin.f32 %v600, 0.0
        %v683 = vmin.f32 %v603, 0.0
        %v684 = vmin.f32 %v606, 0.0
        %v685 = vmin.f32 %v609, 0.0
        %v686 = vmin.f32 %v612, 0.0
        %v687 = vmin.f32 %v615, 0.0
        %v688 = vmin.f32 %v618, 0.0
        %v689 = vmin.f32 %v621, 0.0
        %v690 = vmin.f32 %v624, 0.0
        %v691 = vmin.f32 %v627, 0.0
        %v692 = vmin.f32 %v630, 0.0
        %v693 = vmin.f32 %v633, 0.0
        %v694 = vmin.f32 %v636, 0.0
        %v695 = vmin.f32 %v639, 0.0
        %v697 = vperm.slane %v642, 0
        %v699 = vmul.f32 %v697, %v680
        %v700 = vmul.f32 %v697, %v681
        %v701 = vmul.f32 %v697, %v682
        %v702 = vmul.f32 %v697, %v683
        %v703 = vmul.f32 %v697, %v684
        %v704 = vmul.f32 %v697, %v685
        %v705 = vmul.f32 %v697, %v686
        %v706 = vmul.f32 %v697, %v687
        %v707 = vmul.f32 %v697, %v688
        %v708 = vmul.f32 %v697, %v689
        %v709 = vmul.f32 %v697, %v690
        %v710 = vmul.f32 %v697, %v691
        %v711 = vmul.f32 %v697, %v692
        %v712 = vmul.f32 %v697, %v693
        %v713 = vmul.f32 %v697, %v694
        %v714 = vmul.f32 %v697, %v695
        %v715 = vadd.f32 %v664, %v699
        %v716 = vadd.f32 %v665, %v700
        %v717 = vadd.f32 %v666, %v701
        %v718 = vadd.f32 %v667, %v702
        %v719 = vadd.f32 %v668, %v703
        %v720 = vadd.f32 %v669, %v704
        %v721 = vadd.f32 %v670, %v705
        %v722 = vadd.f32 %v671, %v706
        %v723 = vadd.f32 %v672, %v707
        %v724 = vadd.f32 %v673, %v708
        %v725 = vadd.f32 %v674, %v709
        %v726 = vadd.f32 %v675, %v710
        %v727 = vadd.f32 %v676, %v711
        %v728 = vadd.f32 %v677, %v712
        %v729 = vadd.f32 %v678, %v713
        %v730 = vadd.f32 %v679, %v714
        %v731 = vtanh.pop %v594
        %v732 = vtanh.pop %v597
        %v733 = vtanh.pop %v600
        %v734 = vtanh.pop %v603
        %v735 = vtanh.pop %v606
        %v736 = vtanh.pop %v609
        %v737 = vtanh.pop %v612
        %v738 = vtanh.pop %v615
        %v739 = vtanh.pop %v618
        %v740 = vtanh.pop %v621
        %v741 = vtanh.pop %v624
        %v742 = vtanh.pop %v627
        %v743 = vtanh.pop %v630
        %v744 = vtanh.pop %v633
        %v745 = vtanh.pop %v636
        %v746 = vtanh.pop %v639
        %v748 = vperm.slane %v643, 0
        %v750 = vmul.f32 %v748, %v731
        %v751 = vmul.f32 %v748, %v732
        %v752 = vmul.f32 %v748, %v733
        %v753 = vmul.f32 %v748, %v734
        %v754 = vmul.f32 %v748, %v735
        %v755 = vmul.f32 %v748, %v736
        %v756 = vmul.f32 %v748, %v737
        %v757 = vmul.f32 %v748, %v738
        %v758 = vmul.f32 %v748, %v739
        %v759 = vmul.f32 %v748, %v740
        %v760 = vmul.f32 %v748, %v741
        %v761 = vmul.f32 %v748, %v742
        %v762 = vmul.f32 %v748, %v743
        %v763 = vmul.f32 %v748, %v744
        %v764 = vmul.f32 %v748, %v745
        %v765 = vmul.f32 %v748, %v746
        %v766 = vadd.f32 %v715, %v750
        %v767 = vadd.f32 %v716, %v751
        %v768 = vadd.f32 %v717, %v752
        %v769 = vadd.f32 %v718, %v753
        %v770 = vadd.f32 %v719, %v754
        %v771 = vadd.f32 %v720, %v755
        %v772 = vadd.f32 %v721, %v756
        %v773 = vadd.f32 %v722, %v757
        %v774 = vadd.f32 %v723, %v758
        %v775 = vadd.f32 %v724, %v759
        %v776 = vadd.f32 %v725, %v760
        %v777 = vadd.f32 %v726, %v761
        %v778 = vadd.f32 %v727, %v762
        %v779 = vadd.f32 %v728, %v763
        %v780 = vadd.f32 %v729, %v764
        %v781 = vadd.f32 %v730, %v765
        %v782 = vmul.f32 %v594, 0.5
        %v783 = vmul.f32 %v597, 0.5
        %v784 = vmul.f32 %v600, 0.5
        %v785 = vmul.f32 %v603, 0.5
        %v786 = vmul.f32 %v606, 0.5
        %v787 = vmul.f32 %v609, 0.5
        %v788 = vmul.f32 %v612, 0.5
        %v789 = vmul.f32 %v615, 0.5
        %v790 = vmul.f32 %v618, 0.5
        %v791 = vmul.f32 %v621, 0.5
        %v792 = vmul.f32 %v624, 0.5
        %v793 = vmul.f32 %v627, 0.5
        %v794 = vmul.f32 %v630, 0.5
        %v795 = vmul.f32 %v633, 0.5
        %v796 = vmul.f32 %v636, 0.5
        %v797 = vmul.f32 %v639, 0.5
        %v798 = vtanh.pop %v782
        %v799 = vtanh.pop %v783
        %v800 = vtanh.pop %v784
        %v801 = vtanh.pop %v785
        %v802 = vtanh.pop %v786
        %v803 = vtanh.pop %v787
        %v804 = vtanh.pop %v788
        %v805 = vtanh.pop %v789
        %v806 = vtanh.pop %v790
        %v807 = vtanh.pop %v791
        %v808 = vtanh.pop %v792
        %v809 = vtanh.pop %v793
        %v810 = vtanh.pop %v794
        %v811 = vtanh.pop %v795
        %v812 = vtanh.pop %v796
        %v813 = vtanh.pop %v797
        %v814 = vadd.f32 %v798, 1.0
        %v815 = vadd.f32 %v799, 1.0
        %v816 = vadd.f32 %v800, 1.0
        %v817 = vadd.f32 %v801, 1.0
        %v818 = vadd.f32 %v802, 1.0
        %v819 = vadd.f32 %v803, 1.0
        %v820 = vadd.f32 %v804, 1.0
        %v821 = vadd.f32 %v805, 1.0
        %v822 = vadd.f32 %v806, 1.0
        %v823 = vadd.f32 %v807, 1.0
        %v824 = vadd.f32 %v808, 1.0
        %v825 = vadd.f32 %v809, 1.0
        %v826 = vadd.f32 %v810, 1.0
        %v827 = vadd.f32 %v811, 1.0
        %v828 = vadd.f32 %v812, 1.0
        %v829 = vadd.f32 %v813, 1.0
        %v831 = vperm.slane %v644, 0
        %v833 = vmul.f32 %v831, %v814
        %v834 = vmul.f32 %v831, %v815
        %v835 = vmul.f32 %v831, %v816
        %v836 = vmul.f32 %v831, %v817
        %v837 = vmul.f32 %v831, %v818
        %v838 = vmul.f32 %v831, %v819
        %v839 = vmul.f32 %v831, %v820
        %v840 = vmul.f32 %v831, %v821
        %v841 = vmul.f32 %v831, %v822
        %v842 = vmul.f32 %v831, %v823
        %v843 = vmul.f32 %v831, %v824
        %v844 = vmul.f32 %v831, %v825
        %v845 = vmul.f32 %v831, %v826
        %v846 = vmul.f32 %v831, %v827
        %v847 = vmul.f32 %v831, %v828
        %v848 = vmul.f32 %v831, %v829
        %v849 = vadd.f32 %v766, %v833
        %v850 = vadd.f32 %v767, %v834
        %v851 = vadd.f32 %v768, %v835
        %v852 = vadd.f32 %v769, %v836
        %v853 = vadd.f32 %v770, %v837
        %v854 = vadd.f32 %v771, %v838
        %v855 = vadd.f32 %v772, %v839
        %v856 = vadd.f32 %v773, %v840
        %v857 = vadd.f32 %v774, %v841
        %v858 = vadd.f32 %v775, %v842
        %v859 = vadd.f32 %v776, %v843
        %v860 = vadd.f32 %v777, %v844
        %v861 = vadd.f32 %v778, %v845
        %v862 = vadd.f32 %v779, %v846
        %v863 = vadd.f32 %v780, %v847
        %v864 = vadd.f32 %v781, %v848
        %v865 = vld [vmem:[#allocation7] sm:$0xff]
        %v866 = vld [vmem:[#allocation7 + $0x8] sm:$0xff]
        %v867 = vld [vmem:[#allocation7 + $0x10] sm:$0xff]
        %v868 = vld [vmem:[#allocation7 + $0x18] sm:$0xff]
        %v869 = vld [vmem:[#allocation7 + $0x20] sm:$0xff]
        %v870 = vld [vmem:[#allocation7 + $0x28] sm:$0xff]
        %v871 = vld [vmem:[#allocation7 + $0x30] sm:$0xff]
        %v872 = vld [vmem:[#allocation7 + $0x38] sm:$0xff]
        %v873 = vld [vmem:[#allocation7 + $0x40] sm:$0xff]
        %v874 = vld [vmem:[#allocation7 + $0x48] sm:$0xff]
        %v875 = vld [vmem:[#allocation7 + $0x50] sm:$0xff]
        %v876 = vld [vmem:[#allocation7 + $0x58] sm:$0xff]
        %v877 = vld [vmem:[#allocation7 + $0x60] sm:$0xff]
        %v878 = vld [vmem:[#allocation7 + $0x68] sm:$0xff]
        %v879 = vld [vmem:[#allocation7 + $0x70] sm:$0xff]
        %v880 = vld [vmem:[#allocation7 + $0x78] sm:$0xff]
        %v881 = vld [vmem:[%s8] sm:$0x1]
        %v883 = vperm.slane %v881, 0
        %885 = vmatpush.msra.mxu0 %v880
        %886 = vmatpush.msra.mxu0 %v879
        %887 = vmatpush.msra.mxu0 %v878
        %888 = vmatpush.msra.mxu0 %v877
        %889 = vmatpush.msra.mxu0 %v876
        %890 = vmatpush.msra.mxu0 %v875
        %891 = vmatpush.msra.mxu0 %v874
        %892 = vmatpush.msra.mxu0 %v873
        %893 = vmatpush.msra.mxu0 %v872
        %894 = vmatpush.msra.mxu0 %v871
        %895 = vmatpush.msra.mxu0 %v870
        %896 = vmatpush.msra.mxu0 %v869
        %897 = vmatpush.msra.mxu0 %v868
        %898 = vmatpush.msra.mxu0 %v867
        %899 = vmatpush.msra.mxu0 %v866
        %900 = vmatpush.msra.mxu0 %v865
        %901 = vmatmul.f32.gmra.mxu0 %v849
        %v902 = vpop.f32.mrf.mxu0
        %v903 = vadd.f32 %v883, %v902
        %904 = vmatmul.f32.gmra.mxu0 %v850
        %v905 = vpop.f32.mrf.mxu0
        %v906 = vadd.f32 %v883, %v905
        %907 = vmatmul.f32.gmra.mxu0 %v851
        %v908 = vpop.f32.mrf.mxu0
        %v909 = vadd.f32 %v883, %v908
        %910 = vmatmul.f32.gmra.mxu0 %v852
        %v911 = vpop.f32.mrf.mxu0
        %v912 = vadd.f32 %v883, %v911
        %913 = vmatmul.f32.gmra.mxu0 %v853
        %v914 = vpop.f32.mrf.mxu0
        %v915 = vadd.f32 %v883, %v914
        %916 = vmatmul.f32.gmra.mxu0 %v854
        %v917 = vpop.f32.mrf.mxu0
        %v918 = vadd.f32 %v883, %v917
        %919 = vmatmul.f32.gmra.mxu0 %v855
        %v920 = vpop.f32.mrf.mxu0
        %v921 = vadd.f32 %v883, %v920
        %922 = vmatmul.f32.gmra.mxu0 %v856
        %v923 = vpop.f32.mrf.mxu0
        %v924 = vadd.f32 %v883, %v923
        %925 = vmatmul.f32.gmra.mxu0 %v857
        %v926 = vpop.f32.mrf.mxu0
        %v927 = vadd.f32 %v883, %v926
        %928 = vmatmul.f32.gmra.mxu0 %v858
        %v929 = vpop.f32.mrf.mxu0
        %v930 = vadd.f32 %v883, %v929
        %931 = vmatmul.f32.gmra.mxu0 %v859
        %v932 = vpop.f32.mrf.mxu0
        %v933 = vadd.f32 %v883, %v932
        %934 = vmatmul.f32.gmra.mxu0 %v860
        %v935 = vpop.f32.mrf.mxu0
        %v936 = vadd.f32 %v883, %v935
        %937 = vmatmul.f32.gmra.mxu0 %v861
        %v938 = vpop.f32.mrf.mxu0
        %v939 = vadd.f32 %v883, %v938
        %940 = vmatmul.f32.gmra.mxu0 %v862
        %v941 = vpop.f32.mrf.mxu0
        %v942 = vadd.f32 %v883, %v941
        %943 = vmatmul.f32.gmra.mxu0 %v863
        %v944 = vpop.f32.mrf.mxu0
        %v945 = vadd.f32 %v883, %v944
        %946 = vmatmul.f32.gmra.mxu0 %v864
        %v947 = vpop.f32.mrf.mxu0
        %v948 = vadd.f32 %v883, %v947
        %949 = vdwg.mxu0
        %v950 = vld [vmem:[%s9] sm:$0x1]
        %v951 = vld [vmem:[%s10] sm:$0x1]
        %v952 = vld [vmem:[%s11] sm:$0x1]
        %v953 = vld [vmem:[%s12] sm:$0x1]
        %v954 = vmax.f32 %v903, 0.0
        %v955 = vmax.f32 %v906, 0.0
        %v956 = vmax.f32 %v909, 0.0
        %v957 = vmax.f32 %v912, 0.0
        %v958 = vmax.f32 %v915, 0.0
        %v959 = vmax.f32 %v918, 0.0
        %v960 = vmax.f32 %v921, 0.0
        %v961 = vmax.f32 %v924, 0.0
        %v962 = vmax.f32 %v927, 0.0
        %v963 = vmax.f32 %v930, 0.0
        %v964 = vmax.f32 %v933, 0.0
        %v965 = vmax.f32 %v936, 0.0
        %v966 = vmax.f32 %v939, 0.0
        %v967 = vmax.f32 %v942, 0.0
        %v968 = vmax.f32 %v945, 0.0
        %v969 = vmax.f32 %v948, 0.0
        %v971 = vperm.slane %v950, 0
        %v973 = vmul.f32 %v971, %v954
        %v974 = vmul.f32 %v971, %v955
        %v975 = vmul.f32 %v971, %v956
        %v976 = vmul.f32 %v971, %v957
        %v977 = vmul.f32 %v971, %v958
        %v978 = vmul.f32 %v971, %v959
        %v979 = vmul.f32 %v971, %v960
        %v980 = vmul.f32 %v971, %v961
        %v981 = vmul.f32 %v971, %v962
        %v982 = vmul.f32 %v971, %v963
        %v983 = vmul.f32 %v971, %v964
        %v984 = vmul.f32 %v971, %v965
        %v985 = vmul.f32 %v971, %v966
        %v986 = vmul.f32 %v971, %v967
        %v987 = vmul.f32 %v971, %v968
        %v988 = vmul.f32 %v971, %v969
        %v989 = vmin.f32 %v903, 0.0
        %v990 = vmin.f32 %v906, 0.0
        %v991 = vmin.f32 %v909, 0.0
        %v992 = vmin.f32 %v912, 0.0
        %v993 = vmin.f32 %v915, 0.0
        %v994 = vmin.f32 %v918, 0.0
        %v995 = vmin.f32 %v921, 0.0
        %v996 = vmin.f32 %v924, 0.0
        %v997 = vmin.f32 %v927, 0.0
        %v998 = vmin.f32 %v930, 0.0
        %v999 = vmin.f32 %v933, 0.0
        %v1000 = vmin.f32 %v936, 0.0
        %v1001 = vmin.f32 %v939, 0.0
        %v1002 = vmin.f32 %v942, 0.0
        %v1003 = vmin.f32 %v945, 0.0
        %v1004 = vmin.f32 %v948, 0.0
        %v1006 = vperm.slane %v951, 0
        %v1008 = vmul.f32 %v1006, %v989
        %v1009 = vmul.f32 %v1006, %v990
        %v1010 = vmul.f32 %v1006, %v991
        %v1011 = vmul.f32 %v1006, %v992
        %v1012 = vmul.f32 %v1006, %v993
        %v1013 = vmul.f32 %v1006, %v994
        %v1014 = vmul.f32 %v1006, %v995
        %v1015 = vmul.f32 %v1006, %v996
        %v1016 = vmul.f32 %v1006, %v997
        %v1017 = vmul.f32 %v1006, %v998
        %v1018 = vmul.f32 %v1006, %v999
        %v1019 = vmul.f32 %v1006, %v1000
        %v1020 = vmul.f32 %v1006, %v1001
        %v1021 = vmul.f32 %v1006, %v1002
        %v1022 = vmul.f32 %v1006, %v1003
        %v1023 = vmul.f32 %v1006, %v1004
        %v1024 = vadd.f32 %v973, %v1008
        %v1025 = vadd.f32 %v974, %v1009
        %v1026 = vadd.f32 %v975, %v1010
        %v1027 = vadd.f32 %v976, %v1011
        %v1028 = vadd.f32 %v977, %v1012
        %v1029 = vadd.f32 %v978, %v1013
        %v1030 = vadd.f32 %v979, %v1014
        %v1031 = vadd.f32 %v980, %v1015
        %v1032 = vadd.f32 %v981, %v1016
        %v1033 = vadd.f32 %v982, %v1017
        %v1034 = vadd.f32 %v983, %v1018
        %v1035 = vadd.f32 %v984, %v1019
        %v1036 = vadd.f32 %v985, %v1020
        %v1037 = vadd.f32 %v986, %v1021
        %v1038 = vadd.f32 %v987, %v1022
        %v1039 = vadd.f32 %v988, %v1023
        %v1040 = vtanh.pop %v903
        %v1041 = vtanh.pop %v906
        %v1042 = vtanh.pop %v909
        %v1043 = vtanh.pop %v912
        %v1044 = vtanh.pop %v915
        %v1045 = vtanh.pop %v918
        %v1046 = vtanh.pop %v921
        %v1047 = vtanh.pop %v924
        %v1048 = vtanh.pop %v927
        %v1049 = vtanh.pop %v930
        %v1050 = vtanh.pop %v933
        %v1051 = vtanh.pop %v936
        %v1052 = vtanh.pop %v939
        %v1053 = vtanh.pop %v942
        %v1054 = vtanh.pop %v945
        %v1055 = vtanh.pop %v948
        %v1057 = vperm.slane %v952, 0
        %v1059 = vmul.f32 %v1057, %v1040
        %v1060 = vmul.f32 %v1057, %v1041
        %v1061 = vmul.f32 %v1057, %v1042
        %v1062 = vmul.f32 %v1057, %v1043
        %v1063 = vmul.f32 %v1057, %v1044
        %v1064 = vmul.f32 %v1057, %v1045
        %v1065 = vmul.f32 %v1057, %v1046
        %v1066 = vmul.f32 %v1057, %v1047
        %v1067 = vmul.f32 %v1057, %v1048
        %v1068 = vmul.f32 %v1057, %v1049
        %v1069 = vmul.f32 %v1057, %v1050
        %v1070 = vmul.f32 %v1057, %v1051
        %v1071 = vmul.f32 %v1057, %v1052
        %v1072 = vmul.f32 %v1057, %v1053
        %v1073 = vmul.f32 %v1057, %v1054
        %v1074 = vmul.f32 %v1057, %v1055
        %v1075 = vadd.f32 %v1024, %v1059
        %v1076 = vadd.f32 %v1025, %v1060
        %v1077 = vadd.f32 %v1026, %v1061
        %v1078 = vadd.f32 %v1027, %v1062
        %v1079 = vadd.f32 %v1028, %v1063
        %v1080 = vadd.f32 %v1029, %v1064
        %v1081 = vadd.f32 %v1030, %v1065
        %v1082 = vadd.f32 %v1031, %v1066
        %v1083 = vadd.f32 %v1032, %v1067
        %v1084 = vadd.f32 %v1033, %v1068
        %v1085 = vadd.f32 %v1034, %v1069
        %v1086 = vadd.f32 %v1035, %v1070
        %v1087 = vadd.f32 %v1036, %v1071
        %v1088 = vadd.f32 %v1037, %v1072
        %v1089 = vadd.f32 %v1038, %v1073
        %v1090 = vadd.f32 %v1039, %v1074
        %v1091 = vmul.f32 %v903, 0.5
        %v1092 = vmul.f32 %v906, 0.5
        %v1093 = vmul.f32 %v909, 0.5
        %v1094 = vmul.f32 %v912, 0.5
        %v1095 = vmul.f32 %v915, 0.5
        %v1096 = vmul.f32 %v918, 0.5
        %v1097 = vmul.f32 %v921, 0.5
        %v1098 = vmul.f32 %v924, 0.5
        %v1099 = vmul.f32 %v927, 0.5
        %v1100 = vmul.f32 %v930, 0.5
        %v1101 = vmul.f32 %v933, 0.5
        %v1102 = vmul.f32 %v936, 0.5
        %v1103 = vmul.f32 %v939, 0.5
        %v1104 = vmul.f32 %v942, 0.5
        %v1105 = vmul.f32 %v945, 0.5
        %v1106 = vmul.f32 %v948, 0.5
        %v1107 = vtanh.pop %v1091
        %v1108 = vtanh.pop %v1092
        %v1109 = vtanh.pop %v1093
        %v1110 = vtanh.pop %v1094
        %v1111 = vtanh.pop %v1095
        %v1112 = vtanh.pop %v1096
        %v1113 = vtanh.pop %v1097
        %v1114 = vtanh.pop %v1098
        %v1115 = vtanh.pop %v1099
        %v1116 = vtanh.pop %v1100
        %v1117 = vtanh.pop %v1101
        %v1118 = vtanh.pop %v1102
        %v1119 = vtanh.pop %v1103
        %v1120 = vtanh.pop %v1104
        %v1121 = vtanh.pop %v1105
        %v1122 = vtanh.pop %v1106
        %v1123 = vadd.f32 %v1107, 1.0
        %v1124 = vadd.f32 %v1108, 1.0
        %v1125 = vadd.f32 %v1109, 1.0
        %v1126 = vadd.f32 %v1110, 1.0
        %v1127 = vadd.f32 %v1111, 1.0
        %v1128 = vadd.f32 %v1112, 1.0
        %v1129 = vadd.f32 %v1113, 1.0
        %v1130 = vadd.f32 %v1114, 1.0
        %v1131 = vadd.f32 %v1115, 1.0
        %v1132 = vadd.f32 %v1116, 1.0
        %v1133 = vadd.f32 %v1117, 1.0
        %v1134 = vadd.f32 %v1118, 1.0
        %v1135 = vadd.f32 %v1119, 1.0
        %v1136 = vadd.f32 %v1120, 1.0
        %v1137 = vadd.f32 %v1121, 1.0
        %v1138 = vadd.f32 %v1122, 1.0
        %v1140 = vperm.slane %v953, 0
        %v1142 = vmul.f32 %v1140, %v1123
        %v1143 = vmul.f32 %v1140, %v1124
        %v1144 = vmul.f32 %v1140, %v1125
        %v1145 = vmul.f32 %v1140, %v1126
        %v1146 = vmul.f32 %v1140, %v1127
        %v1147 = vmul.f32 %v1140, %v1128
        %v1148 = vmul.f32 %v1140, %v1129
        %v1149 = vmul.f32 %v1140, %v1130
        %v1150 = vmul.f32 %v1140, %v1131
        %v1151 = vmul.f32 %v1140, %v1132
        %v1152 = vmul.f32 %v1140, %v1133
        %v1153 = vmul.f32 %v1140, %v1134
        %v1154 = vmul.f32 %v1140, %v1135
        %v1155 = vmul.f32 %v1140, %v1136
        %v1156 = vmul.f32 %v1140, %v1137
        %v1157 = vmul.f32 %v1140, %v1138
        %v1158 = vadd.f32 %v1075, %v1142
        %v1159 = vadd.f32 %v1076, %v1143
        %v1160 = vadd.f32 %v1077, %v1144
        %v1161 = vadd.f32 %v1078, %v1145
        %v1162 = vadd.f32 %v1079, %v1146
        %v1163 = vadd.f32 %v1080, %v1147
        %v1164 = vadd.f32 %v1081, %v1148
        %v1165 = vadd.f32 %v1082, %v1149
        %v1166 = vadd.f32 %v1083, %v1150
        %v1167 = vadd.f32 %v1084, %v1151
        %v1168 = vadd.f32 %v1085, %v1152
        %v1169 = vadd.f32 %v1086, %v1153
        %v1170 = vadd.f32 %v1087, %v1154
        %v1171 = vadd.f32 %v1088, %v1155
        %v1172 = vadd.f32 %v1089, %v1156
        %v1173 = vadd.f32 %v1090, %v1157
        %v1174 = vld [vmem:[#allocation8] sm:$0xff]
        %v1175 = vld [vmem:[#allocation8 + $0x8] sm:$0xff]
        %v1176 = vld [vmem:[#allocation8 + $0x10] sm:$0xff]
        %v1177 = vld [vmem:[#allocation8 + $0x18] sm:$0xff]
        %v1178 = vld [vmem:[#allocation8 + $0x20] sm:$0xff]
        %v1179 = vld [vmem:[#allocation8 + $0x28] sm:$0xff]
        %v1180 = vld [vmem:[#allocation8 + $0x30] sm:$0xff]
        %v1181 = vld [vmem:[#allocation8 + $0x38] sm:$0xff]
        %v1182 = vld [vmem:[#allocation8 + $0x40] sm:$0xff]
        %v1183 = vld [vmem:[#allocation8 + $0x48] sm:$0xff]
        %v1184 = vld [vmem:[#allocation8 + $0x50] sm:$0xff]
        %v1185 = vld [vmem:[#allocation8 + $0x58] sm:$0xff]
        %v1186 = vld [vmem:[#allocation8 + $0x60] sm:$0xff]
        %v1187 = vld [vmem:[#allocation8 + $0x68] sm:$0xff]
        %v1188 = vld [vmem:[#allocation8 + $0x70] sm:$0xff]
        %v1189 = vld [vmem:[#allocation8 + $0x78] sm:$0xff]
        %1190 = vmatpush.msra.mxu0 %v1189
        %1191 = vmatpush.msra.mxu0 %v1188
        %1192 = vmatpush.msra.mxu0 %v1187
        %1193 = vmatpush.msra.mxu0 %v1186
        %1194 = vmatpush.msra.mxu0 %v1185
        %1195 = vmatpush.msra.mxu0 %v1184
        %1196 = vmatpush.msra.mxu0 %v1183
        %1197 = vmatpush.msra.mxu0 %v1182
        %1198 = vmatpush.msra.mxu0 %v1181
        %1199 = vmatpush.msra.mxu0 %v1180
        %1200 = vmatpush.msra.mxu0 %v1179
        %1201 = vmatpush.msra.mxu0 %v1178
        %1202 = vmatpush.msra.mxu0 %v1177
        %1203 = vmatpush.msra.mxu0 %v1176
        %1204 = vmatpush.msra.mxu0 %v1175
        %1205 = vmatpush.msra.mxu0 %v1174
        %1206 = vmatmul.f32.gmra.mxu0 %v1158
        %v1207 = vpop.f32.mrf.mxu0
        %v1208 = vadd.f32 0.0, %v1207
        %1209 = vmatmul.f32.gmra.mxu0 %v1159
        %v1210 = vpop.f32.mrf.mxu0
        %v1211 = vadd.f32 0.0, %v1210
        %1212 = vmatmul.f32.gmra.mxu0 %v1160
        %v1213 = vpop.f32.mrf.mxu0
        %v1214 = vadd.f32 0.0, %v1213
        %1215 = vmatmul.f32.gmra.mxu0 %v1161
        %v1216 = vpop.f32.mrf.mxu0
        %v1217 = vadd.f32 0.0, %v1216
        %1218 = vmatmul.f32.gmra.mxu0 %v1162
        %v1219 = vpop.f32.mrf.mxu0
        %v1220 = vadd.f32 0.0, %v1219
        %1221 = vmatmul.f32.gmra.mxu0 %v1163
        %v1222 = vpop.f32.mrf.mxu0
        %v1223 = vadd.f32 0.0, %v1222
        %1224 = vmatmul.f32.gmra.mxu0 %v1164
        %v1225 = vpop.f32.mrf.mxu0
        %v1226 = vadd.f32 0.0, %v1225
        %1227 = vmatmul.f32.gmra.mxu0 %v1165
        %v1228 = vpop.f32.mrf.mxu0
        %v1229 = vadd.f32 0.0, %v1228
        %1230 = vmatmul.f32.gmra.mxu0 %v1166
        %v1231 = vpop.f32.mrf.mxu0
        %v1232 = vadd.f32 0.0, %v1231
        %1233 = vmatmul.f32.gmra.mxu0 %v1167
        %v1234 = vpop.f32.mrf.mxu0
        %v1235 = vadd.f32 0.0, %v1234
        %1236 = vmatmul.f32.gmra.mxu0 %v1168
        %v1237 = vpop.f32.mrf.mxu0
        %v1238 = vadd.f32 0.0, %v1237
        %1239 = vmatmul.f32.gmra.mxu0 %v1169
        %v1240 = vpop.f32.mrf.mxu0
        %v1241 = vadd.f32 0.0, %v1240
        %1242 = vmatmul.f32.gmra.mxu0 %v1170
        %v1243 = vpop.f32.mrf.mxu0
        %v1244 = vadd.f32 0.0, %v1243
        %1245 = vmatmul.f32.gmra.mxu0 %v1171
        %v1246 = vpop.f32.mrf.mxu0
        %v1247 = vadd.f32 0.0, %v1246
        %1248 = vmatmul.f32.gmra.mxu0 %v1172
        %v1249 = vpop.f32.mrf.mxu0
        %v1250 = vadd.f32 0.0, %v1249
        %1251 = vmatmul.f32.gmra.mxu0 %v1173
        %v1252 = vpop.f32.mrf.mxu0
        %v1253 = vadd.f32 0.0, %v1252
        %1254 = vdwg.mxu0
        %1255 = vst [vmem:[%s537] sm:$0xff] %v1208
        %1256 = vst [vmem:[%s537 + $0x8] sm:$0xff] %v1211
        %1257 = vst [vmem:[%s537 + $0x10] sm:$0xff] %v1214
        %1258 = vst [vmem:[%s537 + $0x18] sm:$0xff] %v1217
        %1259 = vst [vmem:[%s537 + $0x20] sm:$0xff] %v1220
        %1260 = vst [vmem:[%s537 + $0x28] sm:$0xff] %v1223
        %1261 = vst [vmem:[%s537 + $0x30] sm:$0xff] %v1226
        %1262 = vst [vmem:[%s537 + $0x38] sm:$0xff] %v1229
        %1263 = vst [vmem:[%s537 + $0x40] sm:$0xff] %v1232
        %1264 = vst [vmem:[%s537 + $0x48] sm:$0xff] %v1235
        %1265 = vst [vmem:[%s537 + $0x50] sm:$0xff] %v1238
        %1266 = vst [vmem:[%s537 + $0x58] sm:$0xff] %v1241
        %1267 = vst [vmem:[%s537 + $0x60] sm:$0xff] %v1244
        %1268 = vst [vmem:[%s537 + $0x68] sm:$0xff] %v1247
        %1269 = vst [vmem:[%s537 + $0x70] sm:$0xff] %v1250
        %1270 = vst [vmem:[%s537 + $0x78] sm:$0xff] %v1253
        %s1271 = sand.u32 %s340, 1
        %s1272 = scalar_lea.sflag [#allocation4], %s1271
        %s1273 = sand.u32 %s340, 1
        %s1274 = smul.addr %s1273, 128
        %s1275 = scalar_lea.vmem [#allocation10], %s1274
        // Predicated region
        $region93: #{tpu_custom_call.1} parent=75 // pred_check
          %p1276 = pneg %p350
        $region94: #{tpu_custom_call.1} parent=75 // pred_check_branch
          %1278 = sbr.rel (%p1276) target = $region96
        $region95: #{tpu_custom_call.1} parent=75 // pred_region
          %s1279 = smul.u32 16, %s33
          %1281 = vsyncadd %s1272, 0
          %s1282 = smul.addr %s1279, 8
          %s1283 = scalar_lea.hbm %s14, %s1282
          %s1284 = sshll.u32 %s1275, 4
          %s1285 = int_to_ptr.vmem [resolvable:$true] %s1284
          %s1286 = sshll.u32 %s1283, 4
          %s1287 = int_to_ptr.hbm [resolvable:$true] %s1286
          %1292 = dma.vmem_to_hbm [thread:$0]  %s1285, 2048, %s1287, %s1272, 128, 128, 8
        $region96: #{tpu_custom_call.1} parent=75 // pred_fallthru
          _
      $region76: #{tpu_custom_call.1} parent=5 // pred_fallthru
        _
      %p1293 = scmp.le.s32.totalorder 2, %s28
      // Predicated region
      $region97: #{tpu_custom_call.1} parent=5 // pred_check
        %p1294 = pneg %p1293
      $region98: #{tpu_custom_call.1} parent=5 // pred_check_branch
        %1296 = sbr.rel (%p1294) target = $region100
      $region99: #{tpu_custom_call.1} parent=5 // pred_region
        %s1297 = ssub.s32 %s28, 2
        // Predicated region
        $region101: #{tpu_custom_call.1} parent=99 // pred_check
          %p1298 = pneg %p356
        $region102: #{tpu_custom_call.1} parent=99 // pred_check_branch
          %1300 = sbr.rel (%p1298) target = $region104
        $region103: #{tpu_custom_call.1} parent=99 // pred_region
          %s1301 = sand.u32 %s341, 1
          %s1302 = scalar_lea.sflag [#allocation4], %s1301
          %s1303 = sand.u32 %s341, 1
          %s1304 = smul.addr %s1303, 128
          %s1305 = scalar_lea.vmem [#allocation10], %s1304
          %1307 = dma.done %s1302, 2048
        $region104: #{tpu_custom_call.1} parent=99 // pred_fallthru
          _
      $region100: #{tpu_custom_call.1} parent=5 // pred_fallthru
        _
    $region6: #{tpu_custom_call.1} parent=1 // loop_footer
      %s32 = sadd.s32 1, %s28
    $region7: #{tpu_custom_call.1} parent=1 // loop_footer_branch
      %27 = sbr.rel target = $region3
    $region8: #{tpu_custom_call.1} parent=1 // loop_exit
      _
    %1308 = vsyncpa [#allocation3], 1
    %s1309 = scalar_lea.sflag [#allocation3], 1
    %1310 = vsyncpa %s1309, 1
    %1311 = vsyncpa [#allocation6], 1
    %1312 = vsyncpa [#allocation9], 1
    %1313 = vsyncpa [#allocation4], 1
    %s1314 = scalar_lea.sflag [#allocation4], 1
    %1315 = vsyncpa %s1314, 1

</llo_original>
